<compile_context>
chip_gen: v7x
topology: tpu7x:2x2x1
jax: 0.10.0
libtpu: 0.0.40
codegen_flags: <defaults>
</compile_context>

<pallas_src>
import functools

import jax
import jax.numpy as jnp
from jax import lax
from jax.experimental import pallas as pl
from jax.experimental.pallas import tpu as pltpu

_LANE = 128            # TPU lane width (last dim)
_SUBLANE = 16          # bf16 sublane packing (second-to-last dim)
_COMPUTE_DTYPE = jnp.bfloat16


def _round_up(x, m):
    return ((x + m - 1) // m) * m


def _pad2d(a, rows, cols, dtype):
    r, c = a.shape
    return jnp.pad(a.astype(dtype), ((0, rows - r), (0, cols - c)))


# ------------------------------ Pallas kernel ------------------------------ #
def _fused_gnn_kernel(*refs, n_gcn, n_fc, tm):
    """Whole GNN forward.  A_hat streamed from HBM; everything else in VMEM.

    refs = [x, adj_hat(HBM), pool,
            (w_i, b_i) for each GCN layer, (w_j, b_j) for each FC layer,
            out,
            adj_buf(2,TM,N), dma_sem(2,), act_0..act_{n_gcn-1}]
    """
    n_params = 2 * (n_gcn + n_fc)
    x_ref = refs[0]
    adj_hbm = refs[1]                     # raw HBM ref [N_pad, N_pad] bf16
    pool_ref = refs[2]
    params = refs[3:3 + n_params]
    out_ref = refs[3 + n_params]
    adj_buf = refs[4 + n_params]          # VMEM (2, TM, N_pad) bf16
    sem = refs[5 + n_params]              # DMA semaphores (2,)
    acts = refs[6 + n_params:]            # per-GCN-layer activation buffers

    n_pad = adj_buf.shape[2]
    n_tiles = n_pad // tm
    single_tile = n_tiles == 1

    def adj_dma(t, slot):
        start = pl.multiple_of(t * tm, tm)
        return pltpu.make_async_copy(
            adj_hbm.at[pl.ds(start, tm), :], adj_buf.at[slot], sem.at[slot])

    # Prime the very first A_hat row tile so its HBM->VMEM DMA overlaps the
    # first X @ W matmul below.
    adj_dma(0, 0).start()

    x_val = x_ref[...]                    # bf16 [N_pad, F0_pad]
    p = 0
    for i in range(n_gcn):
        w = params[p][...]                # bf16 [Fin_pad, Fout_pad]
        b = params[p + 1][...]            # f32  [1, Fout_pad]
        p += 2
        fin_pad, fout_pad = w.shape
        relu = i != n_gcn - 1
        out_act = acts[i]

        # Single-tile graphs: A_hat is already resident in adj_buf[0] after
        # layer 0 -> skip redundant DMA for later layers.
        do_dma = not (single_tile and i > 0)
        if do_dma and i > 0:
            adj_dma(0, 0).start()         # overlaps this layer's X@W

        # Pick matmul order so the N^2-scale aggregation runs at the narrower
        # feature width.
        xw_first = fin_pad >= fout_pad
        if xw_first:
            xw = jnp.dot(x_val, w,
                         preferred_element_type=jnp.float32).astype(_COMPUTE_DTYPE)
        else:
            xw = None

        @pl.loop(0, n_tiles)
        def _(t):
            slot = t % 2
            if do_dma:
                adj_dma(t, slot).wait()

                @pl.when(t + 1 < n_tiles)
                def _():
                    adj_dma(t + 1, 1 - slot).start()
                adj_tile = adj_buf[slot]
            else:
                adj_tile = adj_buf[0]

            if xw_first:
                h = jnp.dot(adj_tile, xw,
                            preferred_element_type=jnp.float32) + b
            else:
                ax = jnp.dot(adj_tile, x_val,
                             preferred_element_type=jnp.float32).astype(_COMPUTE_DTYPE)
                h = jnp.dot(ax, w, preferred_element_type=jnp.float32) + b
            if relu:
                h = jnp.maximum(h, 0.0)
            row = pl.multiple_of(t * tm, tm)
            out_act[pl.ds(row, tm), :] = h.astype(out_act.dtype)

        x_val = out_act[...]

    # global_mean_pool(x, batch) as a matmul with the [G_pad, N_pad] matrix.
    h = jnp.dot(pool_ref[...], x_val, preferred_element_type=jnp.float32)

    # FC head (relu on all but the last layer).
    for i in range(n_fc):
        w = params[p][...]
        b = params[p + 1][...]
        p += 2
        h = jnp.dot(h.astype(_COMPUTE_DTYPE), w,
                    preferred_element_type=jnp.float32) + b
        if i != n_fc - 1:
            h = jnp.maximum(h, 0.0)

    out_ref[...] = h.astype(out_ref.dtype)


# ------------------------------ Wrapper ------------------------------------ #
def _vmem_capacity_bytes():
    """Physical VMEM of the current generation (128 MiB v5e/v6e, 64 MiB v7x)."""
    try:
        info = pltpu.get_tpu_info()
        cap = getattr(info, "vmem_capacity_bytes", None)
        if cap:
            return int(cap)
    except Exception:
        pass
    return 64 * 1024 * 1024   # conservative fallback (v7x per-core VMEM)


def fused_gnn_forward(x_norm, adj_hat, pool, gnn_params, fcnn_params):
    """Pad to lane-dense shapes and run one fused Pallas kernel."""
    num_nodes, f_in = x_norm.shape
    num_graphs = pool.shape[0]

    # Row-tile size for streaming A_hat: 256 keeps the 256-wide MXUs of
    # v6e/v7x fully occupied; tiny graphs collapse to a single tile.
    if num_nodes > 256:
        tm = 256
        n_pad = _round_up(num_nodes, tm)
    else:
        n_pad = _round_up(num_nodes, _LANE)
        tm = n_pad
    g_pad = _round_up(num_graphs, _SUBLANE)
    f0_pad = _round_up(f_in, _LANE)
    # TODO(synk): for f_in << 128 the first X@W still does padded-zero MXU
    # work; it could be computed unpadded in the wrapper instead.

    inputs = [
        _pad2d(x_norm, n_pad, f0_pad, _COMPUTE_DTYPE),
        _pad2d(adj_hat, n_pad, n_pad, _COMPUTE_DTYPE),
        _pad2d(pool, g_pad, n_pad, _COMPUTE_DTYPE),
    ]
    in_specs = [
        pl.BlockSpec(memory_space=pltpu.MemorySpace.VMEM),   # x
        pl.BlockSpec(memory_space=pl.ANY),                   # A_hat stays in HBM
        pl.BlockSpec(memory_space=pltpu.MemorySpace.VMEM),   # pool
    ]

    gcn_fout_pads = []
    flops = 0
    fin = f0_pad
    for w, b in gnn_params:
        fout = _round_up(w.shape[1], _LANE)
        gcn_fout_pads.append(fout)
        inputs.append(_pad2d(w, fin, fout, _COMPUTE_DTYPE))
        inputs.append(jnp.pad(jnp.reshape(b, (1, -1)).astype(jnp.float32),
                              ((0, 0), (0, fout - w.shape[1]))))
        in_specs += [pl.BlockSpec(memory_space=pltpu.MemorySpace.VMEM)] * 2
        flops += 2 * n_pad * fin * fout                 # feature transform
        flops += 2 * n_pad * n_pad * min(fin, fout)     # aggregation matmul
        fin = fout
    flops += 2 * g_pad * n_pad * fin                    # pooling matmul
    for w, b in fcnn_params:
        fout = _round_up(w.shape[1], _LANE)
        inputs.append(_pad2d(w, fin, fout, _COMPUTE_DTYPE))
        inputs.append(jnp.pad(jnp.reshape(b, (1, -1)).astype(jnp.float32),
                              ((0, 0), (0, fout - w.shape[1]))))
        in_specs += [pl.BlockSpec(memory_space=pltpu.MemorySpace.VMEM)] * 2
        flops += 2 * g_pad * fin * fout
        fin = fout
    out_cols = fin

    n_gcn, n_fc = len(gnn_params), len(fcnn_params)

    scratch_shapes = [
        pltpu.VMEM((2, tm, n_pad), _COMPUTE_DTYPE),     # A_hat double buffer
        pltpu.SemaphoreType.DMA((2,)),
    ] + [pltpu.VMEM((n_pad, f), _COMPUTE_DTYPE) for f in gcn_fout_pads]

    # VMEM budget: resident inputs + scratch + temporaries, clamped to this
    # generation's physical VMEM minus compiler headroom.
    resident = sum(int(a.size) * a.dtype.itemsize
                   for a in (inputs[0:1] + inputs[2:]))          # all but adj
    resident += 2 * tm * n_pad * 2                               # adj buffer
    resident += sum(n_pad * f * 2 for f in gcn_fout_pads)        # activations
    resident += n_pad * max([f0_pad] + gcn_fout_pads) * 4        # xw temps
    resident += g_pad * out_cols * 4                             # output
    cap = _vmem_capacity_bytes()
    vmem_limit = int(min(cap - 12 * 1024 * 1024,
                         max(16 * 1024 * 1024, 2 * resident)))

    adj_bytes = n_gcn * n_pad * n_pad * 2   # A_hat streamed once per GCN layer
    io_bytes = adj_bytes + resident

    kernel = functools.partial(_fused_gnn_kernel, n_gcn=n_gcn, n_fc=n_fc, tm=tm)

    out = pl.pallas_call(
        kernel,
        out_shape=jax.ShapeDtypeStruct((g_pad, out_cols), jnp.float32),
        in_specs=in_specs,
        out_specs=pl.BlockSpec(memory_space=pltpu.MemorySpace.VMEM),
        scratch_shapes=scratch_shapes,
        cost_estimate=pl.CostEstimate(flops=int(flops), transcendentals=0,
                                      bytes_accessed=int(io_bytes)),
        compiler_params=pltpu.CompilerParams(vmem_limit_bytes=vmem_limit),
    )(*inputs)

    # Slice away lane / row padding.
    return out[:num_graphs, :fcnn_params[-1][0].shape[1]]


# ------------------------------ JAX glue ------------------------------------ #
def build_gcn_adj(edge_index, num_nodes):
    """D^-1/2 (A + I) D^-1/2 with add_remaining_self_loops semantics."""
    src = edge_index[0]
    dst = edge_index[1]
    not_self = (src != dst).astype(jnp.float32)
    adj = jnp.zeros((num_nodes, num_nodes), jnp.float32)
    adj = adj.at[dst, src].add(not_self)                # messages flow src -> dst
    adj = adj + jnp.eye(num_nodes, dtype=jnp.float32)   # exactly one self-loop each
    deg = adj.sum(axis=1)
    d_inv_sqrt = jnp.where(deg > 0, jax.lax.rsqrt(deg), 0.0)
    return d_inv_sqrt[:, None] * adj * d_inv_sqrt[None, :]


def build_pool_matrix(batch, num_graphs, num_nodes):
    """P[g, i] = 1/|graph g| if node i belongs to graph g (global_mean_pool)."""
    onehot = (batch[None, :] == jnp.arange(num_graphs)[:, None]).astype(jnp.float32)
    counts = onehot.sum(axis=1, keepdims=True)
    return onehot / jnp.maximum(counts, 1.0)


def init_linear(key, fan_in, fan_out):
    kw, kb = jax.random.split(key)
    bound = 1.0 / jnp.sqrt(jnp.float32(fan_in))
    w = jax.random.uniform(kw, (fan_in, fan_out), jnp.float32, -bound, bound)
    b = jax.random.uniform(kb, (fan_out,), jnp.float32, -bound, bound)
    return w, b


def init_params(key, gnn_channels, fcnn_channels):
    params = {"gnn": [], "fcnn": []}
    for i in range(len(gnn_channels) - 1):
        key, sub = jax.random.split(key)
        params["gnn"].append(init_linear(sub, gnn_channels[i], gnn_channels[i + 1]))
    for i in range(len(fcnn_channels) - 1):
        key, sub = jax.random.split(key)
        params["fcnn"].append(init_linear(sub, fcnn_channels[i], fcnn_channels[i + 1]))
    return params


def gnn_forward(x, edge_index, batch, params, mean, std, num_graphs):
    x = (x - mean) / std
    num_nodes = x.shape[0]
    adj_hat = build_gcn_adj(edge_index, num_nodes)
    pool = build_pool_matrix(batch, num_graphs, num_nodes)
    return fused_gnn_forward(x, adj_hat, pool, params["gnn"], params["fcnn"])


def reference_forward(x, adj_hat, pool, params):
    """Pure-JAX f32 reference of the same forward pass."""
    h = x
    gnn = params["gnn"]
    for i, (w, b) in enumerate(gnn):
        h = adj_hat @ (h @ w) + b
        if i != len(gnn) - 1:
            h = jax.nn.relu(h)
    h = pool @ h
    fc = params["fcnn"]
    for i, (w, b) in enumerate(fc):
        h = h @ w + b
        if i != len(fc) - 1:
            h = jax.nn.relu(h)
    return h


if __name__ == "__main__":
    key = jax.random.PRNGKey(0)

    # Small shapes: 16 nodes, 8 input features, 32 edges, 2 graphs.
    num_nodes = 16
    in_feats = 8
    num_edges = 32
    num_graphs = 2
    gnn_channels = [in_feats, 32, 32]
    fcnn_channels = [32, 16, 4]
    mean, std = 0.5, 2.0

    kx, ke, kp = jax.random.split(key, 3)
    x = jax.random.normal(kx, (num_nodes, in_feats), jnp.float32)
    edge_index = jax.random.randint(ke, (2, num_edges), 0, num_nodes, jnp.int32)
    batch = jnp.concatenate(
        [jnp.zeros((num_nodes // 2,), jnp.int32), jnp.ones((num_nodes // 2,), jnp.int32)]
    )

    params = init_params(kp, gnn_channels, fcnn_channels)

    out = gnn_forward(x, edge_index, batch, params, mean, std, num_graphs)
    out = jax.block_until_ready(out)
    assert out.shape == (num_graphs, fcnn_channels[-1]), out.shape
    assert jnp.all(jnp.isfinite(out))

    # Loose-tolerance check against a pure-JAX f32 reference (kernel uses bf16
    # MXU inputs with f32 accumulation).
    xn = (x - mean) / std
    adj_hat = build_gcn_adj(edge_index, num_nodes)
    pool = build_pool_matrix(batch, num_graphs, num_nodes)
    ref = reference_forward(xn, adj_hat, pool, params)
    assert jnp.allclose(out, ref, atol=1e-1, rtol=1e-1), (out, ref)

    print("KERNEL_OK")
</pallas_src>

<mosaic_0001>
module attributes {stable_mosaic.version = 11 : i64} {
  func.func @_fused_gnn_kernel(%arg0: memref<128x128xbf16, #tpu.memory_space<vmem>>, %arg1: memref<128x128xbf16, #tpu.memory_space<any>>, %arg2: memref<16x128xbf16, #tpu.memory_space<vmem>>, %arg3: memref<128x128xbf16, #tpu.memory_space<vmem>>, %arg4: memref<1x128xf32, #tpu.memory_space<vmem>>, %arg5: memref<128x128xbf16, #tpu.memory_space<vmem>>, %arg6: memref<1x128xf32, #tpu.memory_space<vmem>>, %arg7: memref<128x128xbf16, #tpu.memory_space<vmem>>, %arg8: memref<1x128xf32, #tpu.memory_space<vmem>>, %arg9: memref<128x128xbf16, #tpu.memory_space<vmem>>, %arg10: memref<1x128xf32, #tpu.memory_space<vmem>>, %arg11: memref<16x128xf32, #tpu.memory_space<vmem>>, %arg12: memref<2x128x128xbf16, #tpu.memory_space<vmem>>, %arg13: memref<2x!tpu.dma_semaphore, #tpu.memory_space<semaphore_mem>>, %arg14: memref<128x128xbf16, #tpu.memory_space<vmem>>, %arg15: memref<128x128xbf16, #tpu.memory_space<vmem>>) attributes {dimension_semantics = [], scalar_prefetch = 0 : i64, scratch_operands = 4 : i64, tpu.core_type = #tpu.core_type<tc>} {
    %c0_i32 = arith.constant 0 : i32
    %0 = tpu.assume_multiple %c0_i32, 128 : i32
    %c0_i32_0 = arith.constant 0 : i32
    %c0_i32_1 = arith.constant 0 : i32
    %c0_i32_2 = arith.constant 0 : i32
    %1 = tpu.memref_slice %arg1[%0, %c0_i32_2] : memref<128x128xbf16, #tpu.memory_space<any>> -> memref<128x128xbf16, #tpu.memory_space<any>>
    %c0_i32_3 = arith.constant 0 : i32
    %c0_i32_4 = arith.constant 0 : i32
    %2 = tpu.memref_slice %arg12[%c0_i32_0, %c0_i32_3, %c0_i32_4] : memref<2x128x128xbf16, #tpu.memory_space<vmem>> -> memref<1x128x128xbf16, #tpu.memory_space<vmem>>
    %3 = tpu.memref_squeeze %2 : memref<1x128x128xbf16, #tpu.memory_space<vmem>> -> memref<128x128xbf16, #tpu.memory_space<vmem>>
    %4 = tpu.memref_slice %arg13[%c0_i32_1] : memref<2x!tpu.dma_semaphore, #tpu.memory_space<semaphore_mem>> -> memref<1x!tpu.dma_semaphore, #tpu.memory_space<semaphore_mem>>
    %5 = tpu.memref_squeeze %4 : memref<1x!tpu.dma_semaphore, #tpu.memory_space<semaphore_mem>> -> memref<!tpu.dma_semaphore, #tpu.memory_space<semaphore_mem>>
    tpu.enqueue_dma source(%1 : memref<128x128xbf16, #tpu.memory_space<any>>) target(%3 : memref<128x128xbf16, #tpu.memory_space<vmem>>) target_semaphore(%5 : memref<!tpu.dma_semaphore, #tpu.memory_space<semaphore_mem>>)
    %c0 = arith.constant 0 : index
    %c0_5 = arith.constant 0 : index
    %6 = vector.load %arg0[%c0, %c0_5] : memref<128x128xbf16, #tpu.memory_space<vmem>>, vector<128x128xbf16>
    %c0_6 = arith.constant 0 : index
    %c0_7 = arith.constant 0 : index
    %7 = vector.load %arg3[%c0_6, %c0_7] : memref<128x128xbf16, #tpu.memory_space<vmem>>, vector<128x128xbf16>
    %c0_8 = arith.constant 0 : index
    %c0_9 = arith.constant 0 : index
    %8 = vector.load %arg4[%c0_8, %c0_9] : memref<1x128xf32, #tpu.memory_space<vmem>>, vector<1x128xf32>
    %cst = arith.constant dense<0.000000e+00> : vector<128x128xf32>
    %9 = tpu.matmul %6, %7, %cst {dimension_numbers = #tpu.dot_dimension_numbers<[1], [0], [0], [1], [0, 0, 1, 1], [], []>} : vector<128x128xbf16>, vector<128x128xbf16>, vector<128x128xf32> -> vector<128x128xf32>
    %10 = arith.truncf %9 : vector<128x128xf32> to vector<128x128xbf16>
    %c0_i32_10 = arith.constant 0 : i32
    %c1_i32 = arith.constant 1 : i32
    %11 = arith.muli %c0_i32_10, %c1_i32 : i32
    %c0_i32_11 = arith.constant 0 : i32
    %12 = arith.addi %c0_i32_11, %11 : i32
    %c2_i32 = arith.constant 2 : i32
    %c0_i32_12 = arith.constant 0 : i32
    %13 = arith.cmpi eq, %c2_i32, %c0_i32_12 : i32
    %c1_i32_13 = arith.constant 1 : i32
    %14 = arith.select %13, %c1_i32_13, %c2_i32 : i32
    %15 = arith.remsi %12, %14 : i32
    %c0_i32_14 = arith.constant 0 : i32
    %16 = arith.cmpi ne, %15, %c0_i32_14 : i32
    %c0_i32_15 = arith.constant 0 : i32
    %17 = arith.cmpi slt, %15, %c0_i32_15 : i32
    %c0_i32_16 = arith.constant 0 : i32
    %18 = arith.cmpi slt, %14, %c0_i32_16 : i32
    %19 = arith.xori %17, %18 : i1
    %20 = arith.andi %19, %16 : i1
    %21 = arith.addi %15, %14 : i32
    %22 = arith.select %20, %21, %15 : i32
    %c128_i32 = arith.constant 128 : i32
    %23 = arith.muli %12, %c128_i32 : i32
    %24 = tpu.assume_multiple %23, 128 : i32
    %c0_i32_17 = arith.constant 0 : i32
    %25 = tpu.memref_slice %arg1[%24, %c0_i32_17] : memref<128x128xbf16, #tpu.memory_space<any>> -> memref<128x128xbf16, #tpu.memory_space<any>>
    %c0_i32_18 = arith.constant 0 : i32
    %c0_i32_19 = arith.constant 0 : i32
    %26 = tpu.memref_slice %arg12[%22, %c0_i32_18, %c0_i32_19] : memref<2x128x128xbf16, #tpu.memory_space<vmem>> -> memref<1x128x128xbf16, #tpu.memory_space<vmem>>
    %27 = tpu.memref_squeeze %26 : memref<1x128x128xbf16, #tpu.memory_space<vmem>> -> memref<128x128xbf16, #tpu.memory_space<vmem>>
    %28 = tpu.memref_slice %arg13[%22] : memref<2x!tpu.dma_semaphore, #tpu.memory_space<semaphore_mem>> -> memref<1x!tpu.dma_semaphore, #tpu.memory_space<semaphore_mem>>
    %29 = tpu.memref_squeeze %28 : memref<1x!tpu.dma_semaphore, #tpu.memory_space<semaphore_mem>> -> memref<!tpu.dma_semaphore, #tpu.memory_space<semaphore_mem>>
    tpu.wait_dma2 semaphore(%29 : memref<!tpu.dma_semaphore, #tpu.memory_space<semaphore_mem>>) src(%25 : memref<128x128xbf16, #tpu.memory_space<any>>) dst(%27 : memref<128x128xbf16, #tpu.memory_space<vmem>>)
    %c1_i32_20 = arith.constant 1 : i32
    %30 = arith.addi %12, %c1_i32_20 : i32
    %c1_i32_21 = arith.constant 1 : i32
    %31 = arith.cmpi slt, %30, %c1_i32_21 : i32
    %32 = arith.extui %31 : i1 to i32
    %c0_i32_22 = arith.constant 0 : i32
    %33 = arith.cmpi ne, %32, %c0_i32_22 : i32
    scf.if %33 {
      %c1_i32_65 = arith.constant 1 : i32
      %82 = arith.addi %12, %c1_i32_65 : i32
      %c1_i32_66 = arith.constant 1 : i32
      %83 = arith.subi %c1_i32_66, %22 : i32
      %c128_i32_67 = arith.constant 128 : i32
      %84 = arith.muli %82, %c128_i32_67 : i32
      %85 = tpu.assume_multiple %84, 128 : i32
      %c0_i32_68 = arith.constant 0 : i32
      %86 = tpu.memref_slice %arg1[%85, %c0_i32_68] : memref<128x128xbf16, #tpu.memory_space<any>> -> memref<128x128xbf16, #tpu.memory_space<any>>
      %c0_i32_69 = arith.constant 0 : i32
      %c0_i32_70 = arith.constant 0 : i32
      %87 = tpu.memref_slice %arg12[%83, %c0_i32_69, %c0_i32_70] : memref<2x128x128xbf16, #tpu.memory_space<vmem>> -> memref<1x128x128xbf16, #tpu.memory_space<vmem>>
      %88 = tpu.memref_squeeze %87 : memref<1x128x128xbf16, #tpu.memory_space<vmem>> -> memref<128x128xbf16, #tpu.memory_space<vmem>>
      %89 = tpu.memref_slice %arg13[%83] : memref<2x!tpu.dma_semaphore, #tpu.memory_space<semaphore_mem>> -> memref<1x!tpu.dma_semaphore, #tpu.memory_space<semaphore_mem>>
      %90 = tpu.memref_squeeze %89 : memref<1x!tpu.dma_semaphore, #tpu.memory_space<semaphore_mem>> -> memref<!tpu.dma_semaphore, #tpu.memory_space<semaphore_mem>>
      tpu.enqueue_dma source(%86 : memref<128x128xbf16, #tpu.memory_space<any>>) target(%88 : memref<128x128xbf16, #tpu.memory_space<vmem>>) target_semaphore(%90 : memref<!tpu.dma_semaphore, #tpu.memory_space<semaphore_mem>>)
    } else {
    }
    %34 = arith.index_cast %22 : i32 to index
    %c0_23 = arith.constant 0 : index
    %c0_24 = arith.constant 0 : index
    %35 = vector.load %arg12[%34, %c0_23, %c0_24] : memref<2x128x128xbf16, #tpu.memory_space<vmem>>, vector<1x128x128xbf16>
    %36 = vector.shape_cast %35 : vector<1x128x128xbf16> to vector<128x128xbf16>
    %cst_25 = arith.constant dense<0.000000e+00> : vector<128x128xf32>
    %37 = tpu.matmul %36, %10, %cst_25 {dimension_numbers = #tpu.dot_dimension_numbers<[1], [0], [0], [1], [0, 0, 1, 1], [], []>} : vector<128x128xbf16>, vector<128x128xbf16>, vector<128x128xf32> -> vector<128x128xf32>
    %38 = vector.broadcast %8 : vector<1x128xf32> to vector<128x128xf32>
    %39 = arith.addf %37, %38 : vector<128x128xf32>
    %cst_26 = arith.constant 0.000000e+00 : f32
    %40 = vector.broadcast %cst_26 : f32 to vector<128x128xf32>
    %41 = arith.maximumf %39, %40 : vector<128x128xf32>
    %c128_i32_27 = arith.constant 128 : i32
    %42 = arith.muli %12, %c128_i32_27 : i32
    %43 = tpu.assume_multiple %42, 128 : i32
    %44 = arith.truncf %41 : vector<128x128xf32> to vector<128x128xbf16>
    %45 = arith.index_cast %43 : i32 to index
    %c0_28 = arith.constant 0 : index
    %46 = vector.load %arg14[%45, %c0_28] : memref<128x128xbf16, #tpu.memory_space<vmem>>, vector<128x128xbf16>
    tpu.vector_store %arg14[%45, %c0_28], %44 {strides = array<i32>} : memref<128x128xbf16, #tpu.memory_space<vmem>>, vector<128x128xbf16>,
    %c1_i32_29 = arith.constant 1 : i32
    %c0_30 = arith.constant 0 : index
    %c0_31 = arith.constant 0 : index
    %47 = vector.load %arg14[%c0_30, %c0_31] : memref<128x128xbf16, #tpu.memory_space<vmem>>, vector<128x128xbf16>
    %c0_32 = arith.constant 0 : index
    %c0_33 = arith.constant 0 : index
    %48 = vector.load %arg5[%c0_32, %c0_33] : memref<128x128xbf16, #tpu.memory_space<vmem>>, vector<128x128xbf16>
    %c0_34 = arith.constant 0 : index
    %c0_35 = arith.constant 0 : index
    %49 = vector.load %arg6[%c0_34, %c0_35] : memref<1x128xf32, #tpu.memory_space<vmem>>, vector<1x128xf32>
    %cst_36 = arith.constant dense<0.000000e+00> : vector<128x128xf32>
    %50 = tpu.matmul %47, %48, %cst_36 {dimension_numbers = #tpu.dot_dimension_numbers<[1], [0], [0], [1], [0, 0, 1, 1], [], []>} : vector<128x128xbf16>, vector<128x128xbf16>, vector<128x128xf32> -> vector<128x128xf32>
    %51 = arith.truncf %50 : vector<128x128xf32> to vector<128x128xbf16>
    %c0_i32_37 = arith.constant 0 : i32
    %c1_i32_38 = arith.constant 1 : i32
    %52 = arith.muli %c0_i32_37, %c1_i32_38 : i32
    %c0_i32_39 = arith.constant 0 : i32
    %53 = arith.addi %c0_i32_39, %52 : i32
    %c0_40 = arith.constant 0 : index
    %c0_41 = arith.constant 0 : index
    %c0_42 = arith.constant 0 : index
    %54 = vector.load %arg12[%c0_40, %c0_41, %c0_42] : memref<2x128x128xbf16, #tpu.memory_space<vmem>>, vector<1x128x128xbf16>
    %55 = vector.shape_cast %54 : vector<1x128x128xbf16> to vector<128x128xbf16>
    %cst_43 = arith.constant dense<0.000000e+00> : vector<128x128xf32>
    %56 = tpu.matmul %55, %51, %cst_43 {dimension_numbers = #tpu.dot_dimension_numbers<[1], [0], [0], [1], [0, 0, 1, 1], [], []>} : vector<128x128xbf16>, vector<128x128xbf16>, vector<128x128xf32> -> vector<128x128xf32>
    %57 = vector.broadcast %49 : vector<1x128xf32> to vector<128x128xf32>
    %58 = arith.addf %56, %57 : vector<128x128xf32>
    %c128_i32_44 = arith.constant 128 : i32
    %59 = arith.muli %53, %c128_i32_44 : i32
    %60 = tpu.assume_multiple %59, 128 : i32
    %61 = arith.truncf %58 : vector<128x128xf32> to vector<128x128xbf16>
    %62 = arith.index_cast %60 : i32 to index
    %c0_45 = arith.constant 0 : index
    %63 = vector.load %arg15[%62, %c0_45] : memref<128x128xbf16, #tpu.memory_space<vmem>>, vector<128x128xbf16>
    tpu.vector_store %arg15[%62, %c0_45], %61 {strides = array<i32>} : memref<128x128xbf16, #tpu.memory_space<vmem>>, vector<128x128xbf16>,
    %c1_i32_46 = arith.constant 1 : i32
    %c0_47 = arith.constant 0 : index
    %c0_48 = arith.constant 0 : index
    %64 = vector.load %arg15[%c0_47, %c0_48] : memref<128x128xbf16, #tpu.memory_space<vmem>>, vector<128x128xbf16>
    %c0_49 = arith.constant 0 : index
    %c0_50 = arith.constant 0 : index
    %65 = vector.load %arg2[%c0_49, %c0_50] : memref<16x128xbf16, #tpu.memory_space<vmem>>, vector<16x128xbf16>
    %cst_51 = arith.constant dense<0.000000e+00> : vector<16x128xf32>
    %66 = tpu.matmul %65, %64, %cst_51 {dimension_numbers = #tpu.dot_dimension_numbers<[1], [0], [0], [1], [0, 0, 1, 1], [], []>} : vector<16x128xbf16>, vector<128x128xbf16>, vector<16x128xf32> -> vector<16x128xf32>
    %c0_52 = arith.constant 0 : index
    %c0_53 = arith.constant 0 : index
    %67 = vector.load %arg7[%c0_52, %c0_53] : memref<128x128xbf16, #tpu.memory_space<vmem>>, vector<128x128xbf16>
    %c0_54 = arith.constant 0 : index
    %c0_55 = arith.constant 0 : index
    %68 = vector.load %arg8[%c0_54, %c0_55] : memref<1x128xf32, #tpu.memory_space<vmem>>, vector<1x128xf32>
    %69 = arith.truncf %66 : vector<16x128xf32> to vector<16x128xbf16>
    %cst_56 = arith.constant dense<0.000000e+00> : vector<16x128xf32>
    %70 = tpu.matmul %69, %67, %cst_56 {dimension_numbers = #tpu.dot_dimension_numbers<[1], [0], [0], [1], [0, 0, 1, 1], [], []>} : vector<16x128xbf16>, vector<128x128xbf16>, vector<16x128xf32> -> vector<16x128xf32>
    %71 = vector.broadcast %68 : vector<1x128xf32> to vector<16x128xf32>
    %72 = arith.addf %70, %71 : vector<16x128xf32>
    %cst_57 = arith.constant 0.000000e+00 : f32
    %73 = vector.broadcast %cst_57 : f32 to vector<16x128xf32>
    %74 = arith.maximumf %72, %73 : vector<16x128xf32>
    %c0_58 = arith.constant 0 : index
    %c0_59 = arith.constant 0 : index
    %75 = vector.load %arg9[%c0_58, %c0_59] : memref<128x128xbf16, #tpu.memory_space<vmem>>, vector<128x128xbf16>
    %c0_60 = arith.constant 0 : index
    %c0_61 = arith.constant 0 : index
    %76 = vector.load %arg10[%c0_60, %c0_61] : memref<1x128xf32, #tpu.memory_space<vmem>>, vector<1x128xf32>
    %77 = arith.truncf %74 : vector<16x128xf32> to vector<16x128xbf16>
    %cst_62 = arith.constant dense<0.000000e+00> : vector<16x128xf32>
    %78 = tpu.matmul %77, %75, %cst_62 {dimension_numbers = #tpu.dot_dimension_numbers<[1], [0], [0], [1], [0, 0, 1, 1], [], []>} : vector<16x128xbf16>, vector<128x128xbf16>, vector<16x128xf32> -> vector<16x128xf32>
    %79 = vector.broadcast %76 : vector<1x128xf32> to vector<16x128xf32>
    %80 = arith.addf %78, %79 : vector<16x128xf32>
    %c0_63 = arith.constant 0 : index
    %c0_64 = arith.constant 0 : index
    %81 = vector.load %arg11[%c0_63, %c0_64] : memref<16x128xf32, #tpu.memory_space<vmem>>, vector<16x128xf32>
    tpu.vector_store %arg11[%c0_63, %c0_64], %80 {strides = array<i32>} : memref<16x128xf32, #tpu.memory_space<vmem>>, vector<16x128xf32>,
    return
  }
}

</mosaic_0001>

<llo_original>
// kernel: tpu_custom_call.1
$region0: #{tpu_custom_call.1}
  #allocation0 [shape = 'u32[]', space=smem, size = 0x4, offset = 0x4, fixed_abs, tag = 'smem constant byte address 0x4 - core index']
  #allocation1 [shape = 'u32[144,128]{1,0:T(1,128)}', space=vmem, size = 0x12000, scoped, tag = 'internal scratch']
  #allocation2 [shape = 'bf16[2,128,128]{2,1,0:T(16,128)(2,1)}', space=vmem, size = 0x10000, scoped, tag = 'scratch operand']
  #allocation3 [shape = 's32[2]{0}', space=sflag, size = 0x8, scoped, tag = 'scratch operand']
  #allocation4 [shape = 'bf16[128,128]{1,0:T(16,128)(2,1)}', space=vmem, size = 0x8000, scoped, tag = 'scratch operand']
  #allocation5 [shape = 'bf16[128,128]{1,0:T(16,128)(2,1)}', space=vmem, size = 0x8000, scoped, tag = 'scratch operand']
  #allocation18 [shape = 's32[]', space=sflag, size = 0x4, offset = 0, fixed_abs, tag = 'sflag constant byte address 0x0 - dummy sync flag']
  #allocation19 [shape = 's32[]', space=sflag, size = 0x4, offset = 0, fixed_abs, tag = 'sflag constant byte address 0x0 - dummy sync flag']
  #allocation20 [shape = 'u32[]', space=smem, size = 0x4, offset = 0x44, fixed_abs, tag = 'smem constant byte address 0x44 - assertion arg 0']
  #allocation21 [shape = 'u32[]', space=smem, size = 0x4, offset = 0x48, fixed_abs, tag = 'smem constant byte address 0x48 - assertion arg 1']
  %s0 = inlined_call_operand.hbm [shape: bf16[128,128], index: 0, kind: input, shape index: {}]
  %s1 = inlined_call_operand.hbm [shape: bf16[128,128], index: 1, kind: input, shape index: {}]
  %s2 = inlined_call_operand.hbm [shape: bf16[16,128], index: 2, kind: input, shape index: {}]
  %s3 = inlined_call_operand.hbm [shape: bf16[128,128], index: 3, kind: input, shape index: {}]
  %s4 = inlined_call_operand.vmem [shape: f32[1,128], index: 4, kind: input, shape index: {}]
  %s5 = inlined_call_operand.hbm [shape: bf16[128,128], index: 5, kind: input, shape index: {}]
  %s6 = inlined_call_operand.vmem [shape: f32[1,128], index: 6, kind: input, shape index: {}]
  %s7 = inlined_call_operand.hbm [shape: bf16[128,128], index: 7, kind: input, shape index: {}]
  %s8 = inlined_call_operand.vmem [shape: f32[1,128], index: 8, kind: input, shape index: {}]
  %s9 = inlined_call_operand.hbm [shape: bf16[128,128], index: 9, kind: input, shape index: {}]
  %s10 = inlined_call_operand.vmem [shape: f32[1,128], index: 10, kind: input, shape index: {}]
  %s11 = inlined_call_operand.hbm [shape: f32[16,128], index: 11, kind: output, shape index: {}]
  %s12 = sld [smem:[#allocation0]]
  $region78: #{tpu_custom_call.1} parent=0
    _
  %s14 = ssub.s32 1, %s12
  %s15 = scalar_select 0, %s14, %s12
  $region1: #{tpu_custom_call.1} parent=0
    #allocation6 [shape = 'u8[32768]{0}', space=vmem, size = 0x8000, scoped, tag = 'input window, operand 0, single buffered']
    #allocation7 [shape = 's32[1]{0}', space=sflag, size = 0x4, scoped, tag = 'scoped memory for tpu_custom_call.1']
    #allocation8 [shape = 's32[1]{0}', space=sflag, size = 0x4, scoped, tag = 'scoped memory for tpu_custom_call.1']
    #allocation9 [shape = 'u8[4096]{0}', space=vmem, size = 0x1000, scoped, tag = 'input window, operand 2, single buffered']
    #allocation10 [shape = 's32[1]{0}', space=sflag, size = 0x4, scoped, tag = 'scoped memory for tpu_custom_call.1']
    #allocation11 [shape = 'u8[32768]{0}', space=vmem, size = 0x8000, scoped, tag = 'input window, operand 3, single buffered']
    #allocation12 [shape = 'u8[32768]{0}', space=vmem, size = 0x8000, scoped, tag = 'input window, operand 5, single buffered']
    #allocation13 [shape = 's32[1]{0}', space=sflag, size = 0x4, scoped, tag = 'scoped memory for tpu_custom_call.1']
    #allocation14 [shape = 'u8[32768]{0}', space=vmem, size = 0x8000, scoped, tag = 'input window, operand 7, single buffered']
    #allocation15 [shape = 'u8[32768]{0}', space=vmem, size = 0x8000, scoped, tag = 'input window, operand 9, single buffered']
    #allocation16 [shape = 's32[1]{0}', space=sflag, size = 0x4, scoped, tag = 'scoped memory for tpu_custom_call.1']
    #allocation17 [shape = 'u8[8192]{0}', space=vmem, size = 0x2000, scoped, tag = 'output window, operand 0, single buffered']
    %16 = vsyncpa [#allocation7], 0
    %17 = vsyncpa [#allocation10], 0
    %18 = vsyncpa [#allocation13], 0
    %19 = vsyncpa [#allocation16], 0
    %20 = vsyncpa [#allocation8], 0
    // Predicated region
    $region2: #{tpu_custom_call.1} parent=1 // pred_check
      _
    $region3: #{tpu_custom_call.1} parent=1 // pred_check_branch
      %22 = sbr.rel (0) target = $region5
    $region4: #{tpu_custom_call.1} parent=1 // pred_region
      %s24 = ssub.s32 1024, 1024
      %25 = vsyncadd [#allocation7], %s24
      %s26 = sshll.u32 [#allocation6], 4
      %s27 = int_to_ptr.vmem [resolvable:$true] %s26
      %32 = dma.hbm_to_vmem [thread:$0]  %s0, 1024, %s27, [#allocation7], 64, 64, 4
    $region5: #{tpu_custom_call.1} parent=1 // pred_fallthru
      _
    // Predicated region
    $region6: #{tpu_custom_call.1} parent=1 // pred_check
      _
    $region7: #{tpu_custom_call.1} parent=1 // pred_check_branch
      %34 = sbr.rel (0) target = $region9
    $region8: #{tpu_custom_call.1} parent=1 // pred_region
      %s36 = ssub.s32 128, 128
      %37 = vsyncadd [#allocation10], %s36
      %s38 = sshll.u32 [#allocation9], 4
      %s39 = int_to_ptr.vmem [resolvable:$true] %s38
      %44 = dma.hbm_to_vmem [thread:$0]  %s2, 128, %s39, [#allocation10], 64, 64, 4
    $region9: #{tpu_custom_call.1} parent=1 // pred_fallthru
      _
    // Predicated region
    $region10: #{tpu_custom_call.1} parent=1 // pred_check
      _
    $region11: #{tpu_custom_call.1} parent=1 // pred_check_branch
      %46 = sbr.rel (0) target = $region13
    $region12: #{tpu_custom_call.1} parent=1 // pred_region
      %s48 = ssub.s32 1024, 1024
      %49 = vsyncadd [#allocation10], %s48
      %s50 = sshll.u32 [#allocation11], 4
      %s51 = int_to_ptr.vmem [resolvable:$true] %s50
      %56 = dma.hbm_to_vmem [thread:$0]  %s3, 1024, %s51, [#allocation10], 64, 64, 4
    $region13: #{tpu_custom_call.1} parent=1 // pred_fallthru
      _
    // Predicated region
    $region14: #{tpu_custom_call.1} parent=1 // pred_check
      _
    $region15: #{tpu_custom_call.1} parent=1 // pred_check_branch
      %58 = sbr.rel (0) target = $region17
    $region16: #{tpu_custom_call.1} parent=1 // pred_region
      _
    $region17: #{tpu_custom_call.1} parent=1 // pred_fallthru
      _
    // Predicated region
    $region18: #{tpu_custom_call.1} parent=1 // pred_check
      _
    $region19: #{tpu_custom_call.1} parent=1 // pred_check_branch
      %60 = sbr.rel (0) target = $region21
    $region20: #{tpu_custom_call.1} parent=1 // pred_region
      %s62 = ssub.s32 1024, 1024
      %63 = vsyncadd [#allocation13], %s62
      %s64 = sshll.u32 [#allocation12], 4
      %s65 = int_to_ptr.vmem [resolvable:$true] %s64
      %70 = dma.hbm_to_vmem [thread:$0]  %s5, 1024, %s65, [#allocation13], 64, 64, 4
    $region21: #{tpu_custom_call.1} parent=1 // pred_fallthru
      _
    // Predicated region
    $region22: #{tpu_custom_call.1} parent=1 // pred_check
      _
    $region23: #{tpu_custom_call.1} parent=1 // pred_check_branch
      %72 = sbr.rel (0) target = $region25
    $region24: #{tpu_custom_call.1} parent=1 // pred_region
      _
    $region25: #{tpu_custom_call.1} parent=1 // pred_fallthru
      _
    // Predicated region
    $region26: #{tpu_custom_call.1} parent=1 // pred_check
      _
    $region27: #{tpu_custom_call.1} parent=1 // pred_check_branch
      %74 = sbr.rel (0) target = $region29
    $region28: #{tpu_custom_call.1} parent=1 // pred_region
      %s76 = ssub.s32 1024, 1024
      %77 = vsyncadd [#allocation13], %s76
      %s78 = sshll.u32 [#allocation14], 4
      %s79 = int_to_ptr.vmem [resolvable:$true] %s78
      %84 = dma.hbm_to_vmem [thread:$0]  %s7, 1024, %s79, [#allocation13], 64, 64, 4
    $region29: #{tpu_custom_call.1} parent=1 // pred_fallthru
      _
    // Predicated region
    $region30: #{tpu_custom_call.1} parent=1 // pred_check
      _
    $region31: #{tpu_custom_call.1} parent=1 // pred_check_branch
      %86 = sbr.rel (0) target = $region33
    $region32: #{tpu_custom_call.1} parent=1 // pred_region
      _
    $region33: #{tpu_custom_call.1} parent=1 // pred_fallthru
      _
    // Predicated region
    $region34: #{tpu_custom_call.1} parent=1 // pred_check
      _
    $region35: #{tpu_custom_call.1} parent=1 // pred_check_branch
      %88 = sbr.rel (0) target = $region37
    $region36: #{tpu_custom_call.1} parent=1 // pred_region
      %s90 = ssub.s32 1024, 1024
      %91 = vsyncadd [#allocation16], %s90
      %s92 = sshll.u32 [#allocation15], 4
      %s93 = int_to_ptr.vmem [resolvable:$true] %s92
      %98 = dma.hbm_to_vmem [thread:$0]  %s9, 1024, %s93, [#allocation16], 64, 64, 4
    $region37: #{tpu_custom_call.1} parent=1 // pred_fallthru
      _
    // Predicated region
    $region38: #{tpu_custom_call.1} parent=1 // pred_check
      _
    $region39: #{tpu_custom_call.1} parent=1 // pred_check_branch
      %100 = sbr.rel (0) target = $region41
    $region40: #{tpu_custom_call.1} parent=1 // pred_region
      _
    $region41: #{tpu_custom_call.1} parent=1 // pred_fallthru
      _
    // Predicated region
    $region42: #{tpu_custom_call.1} parent=1 // pred_check
      _
    $region43: #{tpu_custom_call.1} parent=1 // pred_check_branch
      %102 = sbr.rel (0) target = $region45
    $region44: #{tpu_custom_call.1} parent=1 // pred_region
      %103 = dma.done [#allocation7], 1024
    $region45: #{tpu_custom_call.1} parent=1 // pred_fallthru
      _
    // Predicated region
    $region46: #{tpu_custom_call.1} parent=1 // pred_check
      _
    $region47: #{tpu_custom_call.1} parent=1 // pred_check_branch
      %105 = sbr.rel (0) target = $region49
    $region48: #{tpu_custom_call.1} parent=1 // pred_region
      %106 = dma.done [#allocation10], 128
    $region49: #{tpu_custom_call.1} parent=1 // pred_fallthru
      _
    // Predicated region
    $region50: #{tpu_custom_call.1} parent=1 // pred_check
      _
    $region51: #{tpu_custom_call.1} parent=1 // pred_check_branch
      %108 = sbr.rel (0) target = $region53
    $region52: #{tpu_custom_call.1} parent=1 // pred_region
      %109 = dma.done [#allocation10], 1024
    $region53: #{tpu_custom_call.1} parent=1 // pred_fallthru
      _
    // Predicated region
    $region54: #{tpu_custom_call.1} parent=1 // pred_check
      _
    $region55: #{tpu_custom_call.1} parent=1 // pred_check_branch
      %111 = sbr.rel (0) target = $region57
    $region56: #{tpu_custom_call.1} parent=1 // pred_region
      %112 = dma.done [#allocation13], 1024
    $region57: #{tpu_custom_call.1} parent=1 // pred_fallthru
      _
    // Predicated region
    $region58: #{tpu_custom_call.1} parent=1 // pred_check
      _
    $region59: #{tpu_custom_call.1} parent=1 // pred_check_branch
      %114 = sbr.rel (0) target = $region61
    $region60: #{tpu_custom_call.1} parent=1 // pred_region
      %115 = dma.done [#allocation13], 1024
    $region61: #{tpu_custom_call.1} parent=1 // pred_fallthru
      _
    // Predicated region
    $region62: #{tpu_custom_call.1} parent=1 // pred_check
      _
    $region63: #{tpu_custom_call.1} parent=1 // pred_check_branch
      %117 = sbr.rel (0) target = $region65
    $region64: #{tpu_custom_call.1} parent=1 // pred_region
      %118 = dma.done [#allocation16], 1024
    $region65: #{tpu_custom_call.1} parent=1 // pred_fallthru
      _
    // Predicated region
    $region66: #{tpu_custom_call.1} parent=1 // pred_check
      _
    $region67: #{tpu_custom_call.1} parent=1 // pred_check_branch
      %121 = sbr.rel target = $region69
    $region68: #{tpu_custom_call.1} parent=1 // pred_region
      %122 = sst [smem:[#allocation20]] [#allocation19]
      %123 = sst [smem:[#allocation21]] [#allocation18]
    $region69: #{tpu_custom_call.1} parent=1 // pred_fallthru
      _
    %125 = shalt.err (0)
    %s127 = sshll.u32 [#allocation2], 4
    %s128 = int_to_ptr.vmem [resolvable:$true] %s127
    %130 = dma.hbm_to_vmem [thread:$0]  %s1, 1024, %s128, [#allocation3]
    %v131 = vld [vmem:[#allocation6] sm:$0xf]
    %v132 = vld [vmem:[#allocation6 + $0x4] sm:$0xf]
    %v133 = vld [vmem:[#allocation6 + $0x8] sm:$0xf]
    %v134 = vld [vmem:[#allocation6 + $0xc] sm:$0xf]
    %v135 = vld [vmem:[#allocation6 + $0x10] sm:$0xf]
    %v136 = vld [vmem:[#allocation6 + $0x14] sm:$0xf]
    %v137 = vld [vmem:[#allocation6 + $0x18] sm:$0xf]
    %v138 = vld [vmem:[#allocation6 + $0x1c] sm:$0xf]
    %v139 = vld [vmem:[#allocation6 + $0x20] sm:$0xf]
    %v140 = vld [vmem:[#allocation6 + $0x24] sm:$0xf]
    %v141 = vld [vmem:[#allocation6 + $0x28] sm:$0xf]
    %v142 = vld [vmem:[#allocation6 + $0x2c] sm:$0xf]
    %v143 = vld [vmem:[#allocation6 + $0x30] sm:$0xf]
    %v144 = vld [vmem:[#allocation6 + $0x34] sm:$0xf]
    %v145 = vld [vmem:[#allocation6 + $0x38] sm:$0xf]
    %v146 = vld [vmem:[#allocation6 + $0x3c] sm:$0xf]
    %v147 = vld [vmem:[#allocation11] sm:$0xf]
    %v148 = vld [vmem:[#allocation11 + $0x4] sm:$0xf]
    %v149 = vld [vmem:[#allocation11 + $0x8] sm:$0xf]
    %v150 = vld [vmem:[#allocation11 + $0xc] sm:$0xf]
    %v151 = vld [vmem:[#allocation11 + $0x10] sm:$0xf]
    %v152 = vld [vmem:[#allocation11 + $0x14] sm:$0xf]
    %v153 = vld [vmem:[#allocation11 + $0x18] sm:$0xf]
    %v154 = vld [vmem:[#allocation11 + $0x1c] sm:$0xf]
    %v155 = vld [vmem:[#allocation11 + $0x20] sm:$0xf]
    %v156 = vld [vmem:[#allocation11 + $0x24] sm:$0xf]
    %v157 = vld [vmem:[#allocation11 + $0x28] sm:$0xf]
    %v158 = vld [vmem:[#allocation11 + $0x2c] sm:$0xf]
    %v159 = vld [vmem:[#allocation11 + $0x30] sm:$0xf]
    %v160 = vld [vmem:[#allocation11 + $0x34] sm:$0xf]
    %v161 = vld [vmem:[#allocation11 + $0x38] sm:$0xf]
    %v162 = vld [vmem:[#allocation11 + $0x3c] sm:$0xf]
    %v163 = vld [vmem:[%s4] sm:$0x1]
    %v180 = vunpack.c.l.b16 %v131
    %v181 = vunpack.c.l.b16 %v132
    %v182 = vunpack.c.l.b16 %v133
    %v183 = vunpack.c.l.b16 %v134
    %v184 = vunpack.c.l.b16 %v135
    %v185 = vunpack.c.l.b16 %v136
    %v186 = vunpack.c.l.b16 %v137
    %v187 = vunpack.c.l.b16 %v138
    %v188 = vunpack.c.l.b16 %v139
    %v189 = vunpack.c.l.b16 %v140
    %v190 = vunpack.c.l.b16 %v141
    %v191 = vunpack.c.l.b16 %v142
    %v192 = vunpack.c.l.b16 %v143
    %v193 = vunpack.c.l.b16 %v144
    %v194 = vunpack.c.l.b16 %v145
    %v195 = vunpack.c.l.b16 %v146
    %v196 = vpack.c.b16 %v181, %v180
    %v197 = vpack.c.b16 %v183, %v182
    %v198 = vpack.c.b16 %v185, %v184
    %v199 = vpack.c.b16 %v187, %v186
    %v200 = vpack.c.b16 %v189, %v188
    %v201 = vpack.c.b16 %v191, %v190
    %v202 = vpack.c.b16 %v193, %v192
    %v203 = vpack.c.b16 %v195, %v194
    %v228 = vunpack.c.l.b16 %v147
    %v229 = vunpack.c.l.b16 %v148
    %v230 = vunpack.c.l.b16 %v149
    %v231 = vunpack.c.l.b16 %v150
    %v232 = vunpack.c.l.b16 %v151
    %v233 = vunpack.c.l.b16 %v152
    %v234 = vunpack.c.l.b16 %v153
    %v235 = vunpack.c.l.b16 %v154
    %v236 = vunpack.c.l.b16 %v155
    %v237 = vunpack.c.l.b16 %v156
    %v238 = vunpack.c.l.b16 %v157
    %v239 = vunpack.c.l.b16 %v158
    %v240 = vunpack.c.l.b16 %v159
    %v241 = vunpack.c.l.b16 %v160
    %v242 = vunpack.c.l.b16 %v161
    %v243 = vunpack.c.l.b16 %v162
    %v244 = vpack.c.b16 %v229, %v228
    %v245 = vpack.c.b16 %v231, %v230
    %v246 = vpack.c.b16 %v233, %v232
    %v247 = vpack.c.b16 %v235, %v234
    %v248 = vpack.c.b16 %v237, %v236
    %v249 = vpack.c.b16 %v239, %v238
    %v250 = vpack.c.b16 %v241, %v240
    %v251 = vpack.c.b16 %v243, %v242
    %260 = vmatprep.subr.bf16.mxu0 0
    %261 = vmatpush1.bf16.msra.mxu0 %v244
    %262 = vmatprep.subr.bf16.mxu0 0
    %263 = vmatpush1.bf16.msra.mxu0 %v245
    %264 = vmatprep.subr.bf16.mxu0 0
    %265 = vmatpush1.bf16.msra.mxu0 %v246
    %266 = vmatprep.subr.bf16.mxu0 0
    %267 = vmatpush1.bf16.msra.mxu0 %v247
    %268 = vmatprep.subr.bf16.mxu0 0
    %269 = vmatpush1.bf16.msra.mxu0 %v248
    %270 = vmatprep.subr.bf16.mxu0 0
    %271 = vmatpush1.bf16.msra.mxu0 %v249
    %272 = vmatprep.subr.bf16.mxu0 0
    %273 = vmatpush1.bf16.msra.mxu0 %v250
    %274 = vmatprep.subr.bf16.mxu0 0
    %275 = vmatpush1.bf16.msra.mxu0 %v251
    %276 = vmatprep.subr.bf16.mxu0 0
    %277 = vmatpush1.bf16.msra.mxu0 0
    %278 = vmatprep.subr.bf16.mxu0 0
    %279 = vmatpush1.bf16.msra.mxu0 0
    %280 = vmatprep.subr.bf16.mxu0 0
    %281 = vmatpush1.bf16.msra.mxu0 0
    %282 = vmatprep.subr.bf16.mxu0 0
    %283 = vmatpush1.bf16.msra.mxu0 0
    %284 = vmatprep.subr.bf16.mxu0 0
    %285 = vmatpush1.bf16.msra.mxu0 0
    %286 = vmatprep.subr.bf16.mxu0 0
    %287 = vmatpush1.bf16.msra.mxu0 0
    %288 = vmatprep.subr.bf16.mxu0 0
    %289 = vmatpush1.bf16.msra.mxu0 0
    %290 = vmatprep.subr.bf16.mxu0 0
    %291 = vmatpush1.bf16.msra.mxu0 0
    %292 = vmatprep.mubr.bf16.mxu0 0
    %293 = vmatmul.mubr.bf16.gmra.mrb[0].mxu0 %v196
    %v294 = vpop.f32.mrb[0].mxu0
    %v295 = vadd.f32 0.0, %v294
    %v296 = vpop.f32.mrb[0].mxu0
    %v297 = vpop.f32.mrb[0].mxu0
    %v298 = vadd.f32 0.0, %v297
    %v299 = vpop.f32.mrb[0].mxu0
    %300 = vmatprep.mubr.bf16.mxu0 0
    %301 = vmatmul.mubr.bf16.gmra.mrb[0].mxu0 %v197
    %v302 = vpop.f32.mrb[0].mxu0
    %v303 = vadd.f32 0.0, %v302
    %v304 = vpop.f32.mrb[0].mxu0
    %v305 = vpop.f32.mrb[0].mxu0
    %v306 = vadd.f32 0.0, %v305
    %v307 = vpop.f32.mrb[0].mxu0
    %308 = vmatprep.mubr.bf16.mxu0 0
    %309 = vmatmul.mubr.bf16.gmra.mrb[0].mxu0 %v198
    %v310 = vpop.f32.mrb[0].mxu0
    %v311 = vadd.f32 0.0, %v310
    %v312 = vpop.f32.mrb[0].mxu0
    %v313 = vpop.f32.mrb[0].mxu0
    %v314 = vadd.f32 0.0, %v313
    %v315 = vpop.f32.mrb[0].mxu0
    %316 = vmatprep.mubr.bf16.mxu0 0
    %317 = vmatmul.mubr.bf16.gmra.mrb[0].mxu0 %v199
    %v318 = vpop.f32.mrb[0].mxu0
    %v319 = vadd.f32 0.0, %v318
    %v320 = vpop.f32.mrb[0].mxu0
    %v321 = vpop.f32.mrb[0].mxu0
    %v322 = vadd.f32 0.0, %v321
    %v323 = vpop.f32.mrb[0].mxu0
    %324 = vmatprep.mubr.bf16.mxu0 0
    %325 = vmatmul.mubr.bf16.gmra.mrb[0].mxu0 %v200
    %v326 = vpop.f32.mrb[0].mxu0
    %v327 = vadd.f32 0.0, %v326
    %v328 = vpop.f32.mrb[0].mxu0
    %v329 = vpop.f32.mrb[0].mxu0
    %v330 = vadd.f32 0.0, %v329
    %v331 = vpop.f32.mrb[0].mxu0
    %332 = vmatprep.mubr.bf16.mxu0 0
    %333 = vmatmul.mubr.bf16.gmra.mrb[0].mxu0 %v201
    %v334 = vpop.f32.mrb[0].mxu0
    %v335 = vadd.f32 0.0, %v334
    %v336 = vpop.f32.mrb[0].mxu0
    %v337 = vpop.f32.mrb[0].mxu0
    %v338 = vadd.f32 0.0, %v337
    %v339 = vpop.f32.mrb[0].mxu0
    %340 = vmatprep.mubr.bf16.mxu0 0
    %341 = vmatmul.mubr.bf16.gmra.mrb[0].mxu0 %v202
    %v342 = vpop.f32.mrb[0].mxu0
    %v343 = vadd.f32 0.0, %v342
    %v344 = vpop.f32.mrb[0].mxu0
    %v345 = vpop.f32.mrb[0].mxu0
    %v346 = vadd.f32 0.0, %v345
    %v347 = vpop.f32.mrb[0].mxu0
    %348 = vmatprep.mubr.bf16.mxu0 0
    %349 = vmatmul.mubr.bf16.gmra.mrb[0].mxu0 %v203
    %v350 = vpop.f32.mrb[0].mxu0
    %v351 = vadd.f32 0.0, %v350
    %v352 = vpop.f32.mrb[0].mxu0
    %v353 = vpop.f32.mrb[0].mxu0
    %v354 = vadd.f32 0.0, %v353
    %v355 = vpop.f32.mrb[0].mxu0
    %356 = vdwg.mxu0
    %v357 = vpack.c.bf16 %v298, %v295
    %v358 = vpack.c.bf16 %v306, %v303
    %v359 = vpack.c.bf16 %v314, %v311
    %v360 = vpack.c.bf16 %v322, %v319
    %v361 = vpack.c.bf16 %v330, %v327
    %v362 = vpack.c.bf16 %v338, %v335
    %v363 = vpack.c.bf16 %v346, %v343
    %v364 = vpack.c.bf16 %v354, %v351
    %s365 = smul.u32 4, 16
    %s366 = smul.u32 %s365, 1
    %s367 = sshll.u32 %s366, 4
    %368 = dma.done [#allocation3], %s367
    %v369 = vld [vmem:[#allocation2] sm:$0xff]
    %v370 = vld [vmem:[#allocation2 + $0x8] sm:$0xff]
    %v371 = vld [vmem:[#allocation2 + $0x10] sm:$0xff]
    %v372 = vld [vmem:[#allocation2 + $0x18] sm:$0xff]
    %v373 = vld [vmem:[#allocation2 + $0x20] sm:$0xff]
    %v374 = vld [vmem:[#allocation2 + $0x28] sm:$0xff]
    %v375 = vld [vmem:[#allocation2 + $0x30] sm:$0xff]
    %v376 = vld [vmem:[#allocation2 + $0x38] sm:$0xff]
    %v378 = vlaneseq
    %v379 = vshrl.u32 %v378, 7
    %v380 = vsub.s32 0, %v379
    %v381 = vrot.slane %v163, %v380
    %383 = vmatprep.subr.bf16.mxu0 0
    %384 = vmatpush1.bf16.msra.mxu0 %v357
    %385 = vmatprep.subr.bf16.mxu0 0
    %386 = vmatpush1.bf16.msra.mxu0 %v358
    %387 = vmatprep.subr.bf16.mxu0 0
    %388 = vmatpush1.bf16.msra.mxu0 %v359
    %389 = vmatprep.subr.bf16.mxu0 0
    %390 = vmatpush1.bf16.msra.mxu0 %v360
    %391 = vmatprep.subr.bf16.mxu0 0
    %392 = vmatpush1.bf16.msra.mxu0 %v361
    %393 = vmatprep.subr.bf16.mxu0 0
    %394 = vmatpush1.bf16.msra.mxu0 %v362
    %395 = vmatprep.subr.bf16.mxu0 0
    %396 = vmatpush1.bf16.msra.mxu0 %v363
    %397 = vmatprep.subr.bf16.mxu0 0
    %398 = vmatpush1.bf16.msra.mxu0 %v364
    %399 = vmatprep.subr.bf16.mxu0 0
    %400 = vmatpush1.bf16.msra.mxu0 0
    %401 = vmatprep.subr.bf16.mxu0 0
    %402 = vmatpush1.bf16.msra.mxu0 0
    %403 = vmatprep.subr.bf16.mxu0 0
    %404 = vmatpush1.bf16.msra.mxu0 0
    %405 = vmatprep.subr.bf16.mxu0 0
    %406 = vmatpush1.bf16.msra.mxu0 0
    %407 = vmatprep.subr.bf16.mxu0 0
    %408 = vmatpush1.bf16.msra.mxu0 0
    %409 = vmatprep.subr.bf16.mxu0 0
    %410 = vmatpush1.bf16.msra.mxu0 0
    %411 = vmatprep.subr.bf16.mxu0 0
    %412 = vmatpush1.bf16.msra.mxu0 0
    %413 = vmatprep.subr.bf16.mxu0 0
    %414 = vmatpush1.bf16.msra.mxu0 0
    %415 = vmatprep.mubr.bf16.mxu0 0
    %416 = vmatmul.mubr.bf16.gmra.mrb[0].mxu0 %v369
    %v417 = vpop.f32.mrb[0].mxu0
    %v418 = vadd.f32 %v381, %v417
    %v419 = vpop.f32.mrb[0].mxu0
    %v420 = vpop.f32.mrb[0].mxu0
    %v421 = vadd.f32 %v381, %v420
    %v422 = vpop.f32.mrb[0].mxu0
    %423 = vmatprep.mubr.bf16.mxu0 0
    %424 = vmatmul.mubr.bf16.gmra.mrb[0].mxu0 %v370
    %v425 = vpop.f32.mrb[0].mxu0
    %v426 = vadd.f32 %v381, %v425
    %v427 = vpop.f32.mrb[0].mxu0
    %v428 = vpop.f32.mrb[0].mxu0
    %v429 = vadd.f32 %v381, %v428
    %v430 = vpop.f32.mrb[0].mxu0
    %431 = vmatprep.mubr.bf16.mxu0 0
    %432 = vmatmul.mubr.bf16.gmra.mrb[0].mxu0 %v371
    %v433 = vpop.f32.mrb[0].mxu0
    %v434 = vadd.f32 %v381, %v433
    %v435 = vpop.f32.mrb[0].mxu0
    %v436 = vpop.f32.mrb[0].mxu0
    %v437 = vadd.f32 %v381, %v436
    %v438 = vpop.f32.mrb[0].mxu0
    %439 = vmatprep.mubr.bf16.mxu0 0
    %440 = vmatmul.mubr.bf16.gmra.mrb[0].mxu0 %v372
    %v441 = vpop.f32.mrb[0].mxu0
    %v442 = vadd.f32 %v381, %v441
    %v443 = vpop.f32.mrb[0].mxu0
    %v444 = vpop.f32.mrb[0].mxu0
    %v445 = vadd.f32 %v381, %v444
    %v446 = vpop.f32.mrb[0].mxu0
    %447 = vmatprep.mubr.bf16.mxu0 0
    %448 = vmatmul.mubr.bf16.gmra.mrb[0].mxu0 %v373
    %v449 = vpop.f32.mrb[0].mxu0
    %v450 = vadd.f32 %v381, %v449
    %v451 = vpop.f32.mrb[0].mxu0
    %v452 = vpop.f32.mrb[0].mxu0
    %v453 = vadd.f32 %v381, %v452
    %v454 = vpop.f32.mrb[0].mxu0
    %455 = vmatprep.mubr.bf16.mxu0 0
    %456 = vmatmul.mubr.bf16.gmra.mrb[0].mxu0 %v374
    %v457 = vpop.f32.mrb[0].mxu0
    %v458 = vadd.f32 %v381, %v457
    %v459 = vpop.f32.mrb[0].mxu0
    %v460 = vpop.f32.mrb[0].mxu0
    %v461 = vadd.f32 %v381, %v460
    %v462 = vpop.f32.mrb[0].mxu0
    %463 = vmatprep.mubr.bf16.mxu0 0
    %464 = vmatmul.mubr.bf16.gmra.mrb[0].mxu0 %v375
    %v465 = vpop.f32.mrb[0].mxu0
    %v466 = vadd.f32 %v381, %v465
    %v467 = vpop.f32.mrb[0].mxu0
    %v468 = vpop.f32.mrb[0].mxu0
    %v469 = vadd.f32 %v381, %v468
    %v470 = vpop.f32.mrb[0].mxu0
    %471 = vmatprep.mubr.bf16.mxu0 0
    %472 = vmatmul.mubr.bf16.gmra.mrb[0].mxu0 %v376
    %v473 = vpop.f32.mrb[0].mxu0
    %v474 = vadd.f32 %v381, %v473
    %v475 = vpop.f32.mrb[0].mxu0
    %v476 = vpop.f32.mrb[0].mxu0
    %v477 = vadd.f32 %v381, %v476
    %v478 = vpop.f32.mrb[0].mxu0
    %479 = vdwg.mxu0
    %v480 = vmax.f32 %v418, 0.0
    %v481 = vmax.f32 %v421, 0.0
    %v482 = vmax.f32 %v426, 0.0
    %v483 = vmax.f32 %v429, 0.0
    %v484 = vmax.f32 %v434, 0.0
    %v485 = vmax.f32 %v437, 0.0
    %v486 = vmax.f32 %v442, 0.0
    %v487 = vmax.f32 %v445, 0.0
    %v488 = vmax.f32 %v450, 0.0
    %v489 = vmax.f32 %v453, 0.0
    %v490 = vmax.f32 %v458, 0.0
    %v491 = vmax.f32 %v461, 0.0
    %v492 = vmax.f32 %v466, 0.0
    %v493 = vmax.f32 %v469, 0.0
    %v494 = vmax.f32 %v474, 0.0
    %v495 = vmax.f32 %v477, 0.0
    %v496 = vpack.c.bf16 %v481, %v480
    %v497 = vpack.c.bf16 %v483, %v482
    %v498 = vpack.c.bf16 %v485, %v484
    %v499 = vpack.c.bf16 %v487, %v486
    %v500 = vpack.c.bf16 %v489, %v488
    %v501 = vpack.c.bf16 %v491, %v490
    %v502 = vpack.c.bf16 %v493, %v492
    %v503 = vpack.c.bf16 %v495, %v494
    %504 = vst [vmem:[#allocation4] sm:$0xff] %v496
    %505 = vst [vmem:[#allocation4 + $0x8] sm:$0xff] %v497
    %506 = vst [vmem:[#allocation4 + $0x10] sm:$0xff] %v498
    %507 = vst [vmem:[#allocation4 + $0x18] sm:$0xff] %v499
    %508 = vst [vmem:[#allocation4 + $0x20] sm:$0xff] %v500
    %509 = vst [vmem:[#allocation4 + $0x28] sm:$0xff] %v501
    %510 = vst [vmem:[#allocation4 + $0x30] sm:$0xff] %v502
    %511 = vst [vmem:[#allocation4 + $0x38] sm:$0xff] %v503
    %v512 = vld [vmem:[#allocation4] sm:$0xff]
    %v513 = vld [vmem:[#allocation4 + $0x8] sm:$0xff]
    %v514 = vld [vmem:[#allocation4 + $0x10] sm:$0xff]
    %v515 = vld [vmem:[#allocation4 + $0x18] sm:$0xff]
    %v516 = vld [vmem:[#allocation4 + $0x20] sm:$0xff]
    %v517 = vld [vmem:[#allocation4 + $0x28] sm:$0xff]
    %v518 = vld [vmem:[#allocation4 + $0x30] sm:$0xff]
    %v519 = vld [vmem:[#allocation4 + $0x38] sm:$0xff]
    %v520 = vld [vmem:[#allocation12] sm:$0xf]
    %v521 = vld [vmem:[#allocation12 + $0x4] sm:$0xf]
    %v522 = vld [vmem:[#allocation12 + $0x8] sm:$0xf]
    %v523 = vld [vmem:[#allocation12 + $0xc] sm:$0xf]
    %v524 = vld [vmem:[#allocation12 + $0x10] sm:$0xf]
    %v525 = vld [vmem:[#allocation12 + $0x14] sm:$0xf]
    %v526 = vld [vmem:[#allocation12 + $0x18] sm:$0xf]
    %v527 = vld [vmem:[#allocation12 + $0x1c] sm:$0xf]
    %v528 = vld [vmem:[#allocation12 + $0x20] sm:$0xf]
    %v529 = vld [vmem:[#allocation12 + $0x24] sm:$0xf]
    %v530 = vld [vmem:[#allocation12 + $0x28] sm:$0xf]
    %v531 = vld [vmem:[#allocation12 + $0x2c] sm:$0xf]
    %v532 = vld [vmem:[#allocation12 + $0x30] sm:$0xf]
    %v533 = vld [vmem:[#allocation12 + $0x34] sm:$0xf]
    %v534 = vld [vmem:[#allocation12 + $0x38] sm:$0xf]
    %v535 = vld [vmem:[#allocation12 + $0x3c] sm:$0xf]
    %v536 = vld [vmem:[%s6] sm:$0x1]
    %v553 = vunpack.c.l.b16 %v520
    %v554 = vunpack.c.l.b16 %v521
    %v555 = vunpack.c.l.b16 %v522
    %v556 = vunpack.c.l.b16 %v523
    %v557 = vunpack.c.l.b16 %v524
    %v558 = vunpack.c.l.b16 %v525
    %v559 = vunpack.c.l.b16 %v526
    %v560 = vunpack.c.l.b16 %v527
    %v561 = vunpack.c.l.b16 %v528
    %v562 = vunpack.c.l.b16 %v529
    %v563 = vunpack.c.l.b16 %v530
    %v564 = vunpack.c.l.b16 %v531
    %v565 = vunpack.c.l.b16 %v532
    %v566 = vunpack.c.l.b16 %v533
    %v567 = vunpack.c.l.b16 %v534
    %v568 = vunpack.c.l.b16 %v535
    %v569 = vpack.c.b16 %v554, %v553
    %v570 = vpack.c.b16 %v556, %v555
    %v571 = vpack.c.b16 %v558, %v557
    %v572 = vpack.c.b16 %v560, %v559
    %v573 = vpack.c.b16 %v562, %v561
    %v574 = vpack.c.b16 %v564, %v563
    %v575 = vpack.c.b16 %v566, %v565
    %v576 = vpack.c.b16 %v568, %v567
    %585 = vmatprep.subr.bf16.mxu0 0
    %586 = vmatpush1.bf16.msra.mxu0 %v569
    %587 = vmatprep.subr.bf16.mxu0 0
    %588 = vmatpush1.bf16.msra.mxu0 %v570
    %589 = vmatprep.subr.bf16.mxu0 0
    %590 = vmatpush1.bf16.msra.mxu0 %v571
    %591 = vmatprep.subr.bf16.mxu0 0
    %592 = vmatpush1.bf16.msra.mxu0 %v572
    %593 = vmatprep.subr.bf16.mxu0 0
    %594 = vmatpush1.bf16.msra.mxu0 %v573
    %595 = vmatprep.subr.bf16.mxu0 0
    %596 = vmatpush1.bf16.msra.mxu0 %v574
    %597 = vmatprep.subr.bf16.mxu0 0
    %598 = vmatpush1.bf16.msra.mxu0 %v575
    %599 = vmatprep.subr.bf16.mxu0 0
    %600 = vmatpush1.bf16.msra.mxu0 %v576
    %601 = vmatprep.subr.bf16.mxu0 0
    %602 = vmatpush1.bf16.msra.mxu0 0
    %603 = vmatprep.subr.bf16.mxu0 0
    %604 = vmatpush1.bf16.msra.mxu0 0
    %605 = vmatprep.subr.bf16.mxu0 0
    %606 = vmatpush1.bf16.msra.mxu0 0
    %607 = vmatprep.subr.bf16.mxu0 0
    %608 = vmatpush1.bf16.msra.mxu0 0
    %609 = vmatprep.subr.bf16.mxu0 0
    %610 = vmatpush1.bf16.msra.mxu0 0
    %611 = vmatprep.subr.bf16.mxu0 0
    %612 = vmatpush1.bf16.msra.mxu0 0
    %613 = vmatprep.subr.bf16.mxu0 0
    %614 = vmatpush1.bf16.msra.mxu0 0
    %615 = vmatprep.subr.bf16.mxu0 0
    %616 = vmatpush1.bf16.msra.mxu0 0
    %617 = vmatprep.mubr.bf16.mxu0 0
    %618 = vmatmul.mubr.bf16.gmra.mrb[0].mxu0 %v512
    %v619 = vpop.f32.mrb[0].mxu0
    %v620 = vadd.f32 0.0, %v619
    %v621 = vpop.f32.mrb[0].mxu0
    %v622 = vpop.f32.mrb[0].mxu0
    %v623 = vadd.f32 0.0, %v622
    %v624 = vpop.f32.mrb[0].mxu0
    %625 = vmatprep.mubr.bf16.mxu0 0
    %626 = vmatmul.mubr.bf16.gmra.mrb[0].mxu0 %v513
    %v627 = vpop.f32.mrb[0].mxu0
    %v628 = vadd.f32 0.0, %v627
    %v629 = vpop.f32.mrb[0].mxu0
    %v630 = vpop.f32.mrb[0].mxu0
    %v631 = vadd.f32 0.0, %v630
    %v632 = vpop.f32.mrb[0].mxu0
    %633 = vmatprep.mubr.bf16.mxu0 0
    %634 = vmatmul.mubr.bf16.gmra.mrb[0].mxu0 %v514
    %v635 = vpop.f32.mrb[0].mxu0
    %v636 = vadd.f32 0.0, %v635
    %v637 = vpop.f32.mrb[0].mxu0
    %v638 = vpop.f32.mrb[0].mxu0
    %v639 = vadd.f32 0.0, %v638
    %v640 = vpop.f32.mrb[0].mxu0
    %641 = vmatprep.mubr.bf16.mxu0 0
    %642 = vmatmul.mubr.bf16.gmra.mrb[0].mxu0 %v515
    %v643 = vpop.f32.mrb[0].mxu0
    %v644 = vadd.f32 0.0, %v643
    %v645 = vpop.f32.mrb[0].mxu0
    %v646 = vpop.f32.mrb[0].mxu0
    %v647 = vadd.f32 0.0, %v646
    %v648 = vpop.f32.mrb[0].mxu0
    %649 = vmatprep.mubr.bf16.mxu0 0
    %650 = vmatmul.mubr.bf16.gmra.mrb[0].mxu0 %v516
    %v651 = vpop.f32.mrb[0].mxu0
    %v652 = vadd.f32 0.0, %v651
    %v653 = vpop.f32.mrb[0].mxu0
    %v654 = vpop.f32.mrb[0].mxu0
    %v655 = vadd.f32 0.0, %v654
    %v656 = vpop.f32.mrb[0].mxu0
    %657 = vmatprep.mubr.bf16.mxu0 0
    %658 = vmatmul.mubr.bf16.gmra.mrb[0].mxu0 %v517
    %v659 = vpop.f32.mrb[0].mxu0
    %v660 = vadd.f32 0.0, %v659
    %v661 = vpop.f32.mrb[0].mxu0
    %v662 = vpop.f32.mrb[0].mxu0
    %v663 = vadd.f32 0.0, %v662
    %v664 = vpop.f32.mrb[0].mxu0
    %665 = vmatprep.mubr.bf16.mxu0 0
    %666 = vmatmul.mubr.bf16.gmra.mrb[0].mxu0 %v518
    %v667 = vpop.f32.mrb[0].mxu0
    %v668 = vadd.f32 0.0, %v667
    %v669 = vpop.f32.mrb[0].mxu0
    %v670 = vpop.f32.mrb[0].mxu0
    %v671 = vadd.f32 0.0, %v670
    %v672 = vpop.f32.mrb[0].mxu0
    %673 = vmatprep.mubr.bf16.mxu0 0
    %674 = vmatmul.mubr.bf16.gmra.mrb[0].mxu0 %v519
    %v675 = vpop.f32.mrb[0].mxu0
    %v676 = vadd.f32 0.0, %v675
    %v677 = vpop.f32.mrb[0].mxu0
    %v678 = vpop.f32.mrb[0].mxu0
    %v679 = vadd.f32 0.0, %v678
    %v680 = vpop.f32.mrb[0].mxu0
    %681 = vdwg.mxu0
    %v682 = vpack.c.bf16 %v623, %v620
    %v683 = vpack.c.bf16 %v631, %v628
    %v684 = vpack.c.bf16 %v639, %v636
    %v685 = vpack.c.bf16 %v647, %v644
    %v686 = vpack.c.bf16 %v655, %v652
    %v687 = vpack.c.bf16 %v663, %v660
    %v688 = vpack.c.bf16 %v671, %v668
    %v689 = vpack.c.bf16 %v679, %v676
    %v690 = vld [vmem:[#allocation2] sm:$0xff]
    %v691 = vld [vmem:[#allocation2 + $0x8] sm:$0xff]
    %v692 = vld [vmem:[#allocation2 + $0x10] sm:$0xff]
    %v693 = vld [vmem:[#allocation2 + $0x18] sm:$0xff]
    %v694 = vld [vmem:[#allocation2 + $0x20] sm:$0xff]
    %v695 = vld [vmem:[#allocation2 + $0x28] sm:$0xff]
    %v696 = vld [vmem:[#allocation2 + $0x30] sm:$0xff]
    %v697 = vld [vmem:[#allocation2 + $0x38] sm:$0xff]
    %v699 = vlaneseq
    %v700 = vshrl.u32 %v699, 7
    %v701 = vsub.s32 0, %v700
    %v702 = vrot.slane %v536, %v701
    %704 = vmatprep.subr.bf16.mxu0 0
    %705 = vmatpush1.bf16.msra.mxu0 %v682
    %706 = vmatprep.subr.bf16.mxu0 0
    %707 = vmatpush1.bf16.msra.mxu0 %v683
    %708 = vmatprep.subr.bf16.mxu0 0
    %709 = vmatpush1.bf16.msra.mxu0 %v684
    %710 = vmatprep.subr.bf16.mxu0 0
    %711 = vmatpush1.bf16.msra.mxu0 %v685
    %712 = vmatprep.subr.bf16.mxu0 0
    %713 = vmatpush1.bf16.msra.mxu0 %v686
    %714 = vmatprep.subr.bf16.mxu0 0
    %715 = vmatpush1.bf16.msra.mxu0 %v687
    %716 = vmatprep.subr.bf16.mxu0 0
    %717 = vmatpush1.bf16.msra.mxu0 %v688
    %718 = vmatprep.subr.bf16.mxu0 0
    %719 = vmatpush1.bf16.msra.mxu0 %v689
    %720 = vmatprep.subr.bf16.mxu0 0
    %721 = vmatpush1.bf16.msra.mxu0 0
    %722 = vmatprep.subr.bf16.mxu0 0
    %723 = vmatpush1.bf16.msra.mxu0 0
    %724 = vmatprep.subr.bf16.mxu0 0
    %725 = vmatpush1.bf16.msra.mxu0 0
    %726 = vmatprep.subr.bf16.mxu0 0
    %727 = vmatpush1.bf16.msra.mxu0 0
    %728 = vmatprep.subr.bf16.mxu0 0
    %729 = vmatpush1.bf16.msra.mxu0 0
    %730 = vmatprep.subr.bf16.mxu0 0
    %731 = vmatpush1.bf16.msra.mxu0 0
    %732 = vmatprep.subr.bf16.mxu0 0
    %733 = vmatpush1.bf16.msra.mxu0 0
    %734 = vmatprep.subr.bf16.mxu0 0
    %735 = vmatpush1.bf16.msra.mxu0 0
    %736 = vmatprep.mubr.bf16.mxu0 0
    %737 = vmatmul.mubr.bf16.gmra.mrb[0].mxu0 %v690
    %v738 = vpop.f32.mrb[0].mxu0
    %v739 = vadd.f32 %v702, %v738
    %v740 = vpop.f32.mrb[0].mxu0
    %v741 = vpop.f32.mrb[0].mxu0
    %v742 = vadd.f32 %v702, %v741
    %v743 = vpop.f32.mrb[0].mxu0
    %744 = vmatprep.mubr.bf16.mxu0 0
    %745 = vmatmul.mubr.bf16.gmra.mrb[0].mxu0 %v691
    %v746 = vpop.f32.mrb[0].mxu0
    %v747 = vadd.f32 %v702, %v746
    %v748 = vpop.f32.mrb[0].mxu0
    %v749 = vpop.f32.mrb[0].mxu0
    %v750 = vadd.f32 %v702, %v749
    %v751 = vpop.f32.mrb[0].mxu0
    %752 = vmatprep.mubr.bf16.mxu0 0
    %753 = vmatmul.mubr.bf16.gmra.mrb[0].mxu0 %v692
    %v754 = vpop.f32.mrb[0].mxu0
    %v755 = vadd.f32 %v702, %v754
    %v756 = vpop.f32.mrb[0].mxu0
    %v757 = vpop.f32.mrb[0].mxu0
    %v758 = vadd.f32 %v702, %v757
    %v759 = vpop.f32.mrb[0].mxu0
    %760 = vmatprep.mubr.bf16.mxu0 0
    %761 = vmatmul.mubr.bf16.gmra.mrb[0].mxu0 %v693
    %v762 = vpop.f32.mrb[0].mxu0
    %v763 = vadd.f32 %v702, %v762
    %v764 = vpop.f32.mrb[0].mxu0
    %v765 = vpop.f32.mrb[0].mxu0
    %v766 = vadd.f32 %v702, %v765
    %v767 = vpop.f32.mrb[0].mxu0
    %768 = vmatprep.mubr.bf16.mxu0 0
    %769 = vmatmul.mubr.bf16.gmra.mrb[0].mxu0 %v694
    %v770 = vpop.f32.mrb[0].mxu0
    %v771 = vadd.f32 %v702, %v770
    %v772 = vpop.f32.mrb[0].mxu0
    %v773 = vpop.f32.mrb[0].mxu0
    %v774 = vadd.f32 %v702, %v773
    %v775 = vpop.f32.mrb[0].mxu0
    %776 = vmatprep.mubr.bf16.mxu0 0
    %777 = vmatmul.mubr.bf16.gmra.mrb[0].mxu0 %v695
    %v778 = vpop.f32.mrb[0].mxu0
    %v779 = vadd.f32 %v702, %v778
    %v780 = vpop.f32.mrb[0].mxu0
    %v781 = vpop.f32.mrb[0].mxu0
    %v782 = vadd.f32 %v702, %v781
    %v783 = vpop.f32.mrb[0].mxu0
    %784 = vmatprep.mubr.bf16.mxu0 0
    %785 = vmatmul.mubr.bf16.gmra.mrb[0].mxu0 %v696
    %v786 = vpop.f32.mrb[0].mxu0
    %v787 = vadd.f32 %v702, %v786
    %v788 = vpop.f32.mrb[0].mxu0
    %v789 = vpop.f32.mrb[0].mxu0
    %v790 = vadd.f32 %v702, %v789
    %v791 = vpop.f32.mrb[0].mxu0
    %792 = vmatprep.mubr.bf16.mxu0 0
    %793 = vmatmul.mubr.bf16.gmra.mrb[0].mxu0 %v697
    %v794 = vpop.f32.mrb[0].mxu0
    %v795 = vadd.f32 %v702, %v794
    %v796 = vpop.f32.mrb[0].mxu0
    %v797 = vpop.f32.mrb[0].mxu0
    %v798 = vadd.f32 %v702, %v797
    %v799 = vpop.f32.mrb[0].mxu0
    %800 = vdwg.mxu0
    %v801 = vpack.c.bf16 %v742, %v739
    %v802 = vpack.c.bf16 %v750, %v747
    %v803 = vpack.c.bf16 %v758, %v755
    %v804 = vpack.c.bf16 %v766, %v763
    %v805 = vpack.c.bf16 %v774, %v771
    %v806 = vpack.c.bf16 %v782, %v779
    %v807 = vpack.c.bf16 %v790, %v787
    %v808 = vpack.c.bf16 %v798, %v795
    %809 = vst [vmem:[#allocation5] sm:$0xff] %v801
    %810 = vst [vmem:[#allocation5 + $0x8] sm:$0xff] %v802
    %811 = vst [vmem:[#allocation5 + $0x10] sm:$0xff] %v803
    %812 = vst [vmem:[#allocation5 + $0x18] sm:$0xff] %v804
    %813 = vst [vmem:[#allocation5 + $0x20] sm:$0xff] %v805
    %814 = vst [vmem:[#allocation5 + $0x28] sm:$0xff] %v806
    %815 = vst [vmem:[#allocation5 + $0x30] sm:$0xff] %v807
    %816 = vst [vmem:[#allocation5 + $0x38] sm:$0xff] %v808
    %v817 = vld [vmem:[#allocation5] sm:$0xff]
    %v818 = vld [vmem:[#allocation5 + $0x8] sm:$0xff]
    %v819 = vld [vmem:[#allocation5 + $0x10] sm:$0xff]
    %v820 = vld [vmem:[#allocation5 + $0x18] sm:$0xff]
    %v821 = vld [vmem:[#allocation5 + $0x20] sm:$0xff]
    %v822 = vld [vmem:[#allocation5 + $0x28] sm:$0xff]
    %v823 = vld [vmem:[#allocation5 + $0x30] sm:$0xff]
    %v824 = vld [vmem:[#allocation5 + $0x38] sm:$0xff]
    %v825 = vld [vmem:[#allocation9] sm:$0xf]
    %v826 = vld [vmem:[#allocation9 + $0x4] sm:$0xf]
    %v829 = vunpack.c.l.b16 %v825
    %v830 = vunpack.c.l.b16 %v826
    %v831 = vpack.c.b16 %v830, %v829
    %833 = vmatprep.subr.bf16.mxu0 0
    %834 = vmatpush1.bf16.msra.mxu0 %v817
    %835 = vmatprep.subr.bf16.mxu0 0
    %836 = vmatpush1.bf16.msra.mxu0 %v818
    %837 = vmatprep.subr.bf16.mxu0 0
    %838 = vmatpush1.bf16.msra.mxu0 %v819
    %839 = vmatprep.subr.bf16.mxu0 0
    %840 = vmatpush1.bf16.msra.mxu0 %v820
    %841 = vmatprep.subr.bf16.mxu0 0
    %842 = vmatpush1.bf16.msra.mxu0 %v821
    %843 = vmatprep.subr.bf16.mxu0 0
    %844 = vmatpush1.bf16.msra.mxu0 %v822
    %845 = vmatprep.subr.bf16.mxu0 0
    %846 = vmatpush1.bf16.msra.mxu0 %v823
    %847 = vmatprep.subr.bf16.mxu0 0
    %848 = vmatpush1.bf16.msra.mxu0 %v824
    %849 = vmatprep.subr.bf16.mxu0 0
    %850 = vmatpush1.bf16.msra.mxu0 0
    %851 = vmatprep.subr.bf16.mxu0 0
    %852 = vmatpush1.bf16.msra.mxu0 0
    %853 = vmatprep.subr.bf16.mxu0 0
    %854 = vmatpush1.bf16.msra.mxu0 0
    %855 = vmatprep.subr.bf16.mxu0 0
    %856 = vmatpush1.bf16.msra.mxu0 0
    %857 = vmatprep.subr.bf16.mxu0 0
    %858 = vmatpush1.bf16.msra.mxu0 0
    %859 = vmatprep.subr.bf16.mxu0 0
    %860 = vmatpush1.bf16.msra.mxu0 0
    %861 = vmatprep.subr.bf16.mxu0 0
    %862 = vmatpush1.bf16.msra.mxu0 0
    %863 = vmatprep.subr.bf16.mxu0 0
    %864 = vmatpush1.bf16.msra.mxu0 0
    %865 = vmatprep.mubr.bf16.mxu0 0
    %866 = vmatmul.mubr.bf16.gmra.mrb[0].mxu0 %v831
    %v867 = vpop.f32.mrb[0].mxu0
    %v868 = vadd.f32 0.0, %v867
    %v869 = vpop.f32.mrb[0].mxu0
    %v870 = vpop.f32.mrb[0].mxu0
    %v871 = vadd.f32 0.0, %v870
    %v872 = vpop.f32.mrb[0].mxu0
    %873 = vdwg.mxu0
    %v874 = vld [vmem:[#allocation14] sm:$0xf]
    %v875 = vld [vmem:[#allocation14 + $0x4] sm:$0xf]
    %v876 = vld [vmem:[#allocation14 + $0x8] sm:$0xf]
    %v877 = vld [vmem:[#allocation14 + $0xc] sm:$0xf]
    %v878 = vld [vmem:[#allocation14 + $0x10] sm:$0xf]
    %v879 = vld [vmem:[#allocation14 + $0x14] sm:$0xf]
    %v880 = vld [vmem:[#allocation14 + $0x18] sm:$0xf]
    %v881 = vld [vmem:[#allocation14 + $0x1c] sm:$0xf]
    %v882 = vld [vmem:[#allocation14 + $0x20] sm:$0xf]
    %v883 = vld [vmem:[#allocation14 + $0x24] sm:$0xf]
    %v884 = vld [vmem:[#allocation14 + $0x28] sm:$0xf]
    %v885 = vld [vmem:[#allocation14 + $0x2c] sm:$0xf]
    %v886 = vld [vmem:[#allocation14 + $0x30] sm:$0xf]
    %v887 = vld [vmem:[#allocation14 + $0x34] sm:$0xf]
    %v888 = vld [vmem:[#allocation14 + $0x38] sm:$0xf]
    %v889 = vld [vmem:[#allocation14 + $0x3c] sm:$0xf]
    %v890 = vld [vmem:[%s8] sm:$0x1]
    %v891 = vpack.c.bf16 %v871, %v868
    %v893 = vlaneseq
    %v894 = vshrl.u32 %v893, 7
    %v895 = vsub.s32 0, %v894
    %v896 = vrot.slane %v890, %v895
    %v914 = vunpack.c.l.b16 %v874
    %v915 = vunpack.c.l.b16 %v875
    %v916 = vunpack.c.l.b16 %v876
    %v917 = vunpack.c.l.b16 %v877
    %v918 = vunpack.c.l.b16 %v878
    %v919 = vunpack.c.l.b16 %v879
    %v920 = vunpack.c.l.b16 %v880
    %v921 = vunpack.c.l.b16 %v881
    %v922 = vunpack.c.l.b16 %v882
    %v923 = vunpack.c.l.b16 %v883
    %v924 = vunpack.c.l.b16 %v884
    %v925 = vunpack.c.l.b16 %v885
    %v926 = vunpack.c.l.b16 %v886
    %v927 = vunpack.c.l.b16 %v887
    %v928 = vunpack.c.l.b16 %v888
    %v929 = vunpack.c.l.b16 %v889
    %v930 = vpack.c.b16 %v915, %v914
    %v931 = vpack.c.b16 %v917, %v916
    %v932 = vpack.c.b16 %v919, %v918
    %v933 = vpack.c.b16 %v921, %v920
    %v934 = vpack.c.b16 %v923, %v922
    %v935 = vpack.c.b16 %v925, %v924
    %v936 = vpack.c.b16 %v927, %v926
    %v937 = vpack.c.b16 %v929, %v928
    %946 = vmatprep.subr.bf16.mxu0 0
    %947 = vmatpush1.bf16.msra.mxu0 %v930
    %948 = vmatprep.subr.bf16.mxu0 0
    %949 = vmatpush1.bf16.msra.mxu0 %v931
    %950 = vmatprep.subr.bf16.mxu0 0
    %951 = vmatpush1.bf16.msra.mxu0 %v932
    %952 = vmatprep.subr.bf16.mxu0 0
    %953 = vmatpush1.bf16.msra.mxu0 %v933
    %954 = vmatprep.subr.bf16.mxu0 0
    %955 = vmatpush1.bf16.msra.mxu0 %v934
    %956 = vmatprep.subr.bf16.mxu0 0
    %957 = vmatpush1.bf16.msra.mxu0 %v935
    %958 = vmatprep.subr.bf16.mxu0 0
    %959 = vmatpush1.bf16.msra.mxu0 %v936
    %960 = vmatprep.subr.bf16.mxu0 0
    %961 = vmatpush1.bf16.msra.mxu0 %v937
    %962 = vmatprep.subr.bf16.mxu0 0
    %963 = vmatpush1.bf16.msra.mxu0 0
    %964 = vmatprep.subr.bf16.mxu0 0
    %965 = vmatpush1.bf16.msra.mxu0 0
    %966 = vmatprep.subr.bf16.mxu0 0
    %967 = vmatpush1.bf16.msra.mxu0 0
    %968 = vmatprep.subr.bf16.mxu0 0
    %969 = vmatpush1.bf16.msra.mxu0 0
    %970 = vmatprep.subr.bf16.mxu0 0
    %971 = vmatpush1.bf16.msra.mxu0 0
    %972 = vmatprep.subr.bf16.mxu0 0
    %973 = vmatpush1.bf16.msra.mxu0 0
    %974 = vmatprep.subr.bf16.mxu0 0
    %975 = vmatpush1.bf16.msra.mxu0 0
    %976 = vmatprep.subr.bf16.mxu0 0
    %977 = vmatpush1.bf16.msra.mxu0 0
    %978 = vmatprep.mubr.bf16.mxu0 0
    %979 = vmatmul.mubr.bf16.gmra.mrb[0].mxu0 %v891
    %v980 = vpop.f32.mrb[0].mxu0
    %v981 = vadd.f32 %v896, %v980
    %v982 = vpop.f32.mrb[0].mxu0
    %v983 = vpop.f32.mrb[0].mxu0
    %v984 = vadd.f32 %v896, %v983
    %v985 = vpop.f32.mrb[0].mxu0
    %986 = vdwg.mxu0
    %v987 = vmax.f32 %v981, 0.0
    %v988 = vmax.f32 %v984, 0.0
    %v989 = vld [vmem:[#allocation15] sm:$0xf]
    %v990 = vld [vmem:[#allocation15 + $0x4] sm:$0xf]
    %v991 = vld [vmem:[#allocation15 + $0x8] sm:$0xf]
    %v992 = vld [vmem:[#allocation15 + $0xc] sm:$0xf]
    %v993 = vld [vmem:[#allocation15 + $0x10] sm:$0xf]
    %v994 = vld [vmem:[#allocation15 + $0x14] sm:$0xf]
    %v995 = vld [vmem:[#allocation15 + $0x18] sm:$0xf]
    %v996 = vld [vmem:[#allocation15 + $0x1c] sm:$0xf]
    %v997 = vld [vmem:[#allocation15 + $0x20] sm:$0xf]
    %v998 = vld [vmem:[#allocation15 + $0x24] sm:$0xf]
    %v999 = vld [vmem:[#allocation15 + $0x28] sm:$0xf]
    %v1000 = vld [vmem:[#allocation15 + $0x2c] sm:$0xf]
    %v1001 = vld [vmem:[#allocation15 + $0x30] sm:$0xf]
    %v1002 = vld [vmem:[#allocation15 + $0x34] sm:$0xf]
    %v1003 = vld [vmem:[#allocation15 + $0x38] sm:$0xf]
    %v1004 = vld [vmem:[#allocation15 + $0x3c] sm:$0xf]
    %v1005 = vld [vmem:[%s10] sm:$0x1]
    %v1006 = vpack.c.bf16 %v988, %v987
    %v1008 = vlaneseq
    %v1009 = vshrl.u32 %v1008, 7
    %v1010 = vsub.s32 0, %v1009
    %v1011 = vrot.slane %v1005, %v1010
    %v1029 = vunpack.c.l.b16 %v989
    %v1030 = vunpack.c.l.b16 %v990
    %v1031 = vunpack.c.l.b16 %v991
    %v1032 = vunpack.c.l.b16 %v992
    %v1033 = vunpack.c.l.b16 %v993
    %v1034 = vunpack.c.l.b16 %v994
    %v1035 = vunpack.c.l.b16 %v995
    %v1036 = vunpack.c.l.b16 %v996
    %v1037 = vunpack.c.l.b16 %v997
    %v1038 = vunpack.c.l.b16 %v998
    %v1039 = vunpack.c.l.b16 %v999
    %v1040 = vunpack.c.l.b16 %v1000
    %v1041 = vunpack.c.l.b16 %v1001
    %v1042 = vunpack.c.l.b16 %v1002
    %v1043 = vunpack.c.l.b16 %v1003
    %v1044 = vunpack.c.l.b16 %v1004
    %v1045 = vpack.c.b16 %v1030, %v1029
    %v1046 = vpack.c.b16 %v1032, %v1031
    %v1047 = vpack.c.b16 %v1034, %v1033
    %v1048 = vpack.c.b16 %v1036, %v1035
    %v1049 = vpack.c.b16 %v1038, %v1037
    %v1050 = vpack.c.b16 %v1040, %v1039
    %v1051 = vpack.c.b16 %v1042, %v1041
    %v1052 = vpack.c.b16 %v1044, %v1043
    %1061 = vmatprep.subr.bf16.mxu0 0
    %1062 = vmatpush1.bf16.msra.mxu0 %v1045
    %1063 = vmatprep.subr.bf16.mxu0 0
    %1064 = vmatpush1.bf16.msra.mxu0 %v1046
    %1065 = vmatprep.subr.bf16.mxu0 0
    %1066 = vmatpush1.bf16.msra.mxu0 %v1047
    %1067 = vmatprep.subr.bf16.mxu0 0
    %1068 = vmatpush1.bf16.msra.mxu0 %v1048
    %1069 = vmatprep.subr.bf16.mxu0 0
    %1070 = vmatpush1.bf16.msra.mxu0 %v1049
    %1071 = vmatprep.subr.bf16.mxu0 0
    %1072 = vmatpush1.bf16.msra.mxu0 %v1050
    %1073 = vmatprep.subr.bf16.mxu0 0
    %1074 = vmatpush1.bf16.msra.mxu0 %v1051
    %1075 = vmatprep.subr.bf16.mxu0 0
    %1076 = vmatpush1.bf16.msra.mxu0 %v1052
    %1077 = vmatprep.subr.bf16.mxu0 0
    %1078 = vmatpush1.bf16.msra.mxu0 0
    %1079 = vmatprep.subr.bf16.mxu0 0
    %1080 = vmatpush1.bf16.msra.mxu0 0
    %1081 = vmatprep.subr.bf16.mxu0 0
    %1082 = vmatpush1.bf16.msra.mxu0 0
    %1083 = vmatprep.subr.bf16.mxu0 0
    %1084 = vmatpush1.bf16.msra.mxu0 0
    %1085 = vmatprep.subr.bf16.mxu0 0
    %1086 = vmatpush1.bf16.msra.mxu0 0
    %1087 = vmatprep.subr.bf16.mxu0 0
    %1088 = vmatpush1.bf16.msra.mxu0 0
    %1089 = vmatprep.subr.bf16.mxu0 0
    %1090 = vmatpush1.bf16.msra.mxu0 0
    %1091 = vmatprep.subr.bf16.mxu0 0
    %1092 = vmatpush1.bf16.msra.mxu0 0
    %1093 = vmatprep.mubr.bf16.mxu0 0
    %1094 = vmatmul.mubr.bf16.gmra.mrb[0].mxu0 %v1006
    %v1095 = vpop.f32.mrb[0].mxu0
    %v1096 = vadd.f32 %v1011, %v1095
    %v1097 = vpop.f32.mrb[0].mxu0
    %v1098 = vpop.f32.mrb[0].mxu0
    %v1099 = vadd.f32 %v1011, %v1098
    %v1100 = vpop.f32.mrb[0].mxu0
    %1101 = vdwg.mxu0
    %1102 = vst [vmem:[#allocation17] sm:$0xff] %v1096
    %1103 = vst [vmem:[#allocation17 + $0x8] sm:$0xff] %v1099
    // Predicated region
    $region70: #{tpu_custom_call.1} parent=1 // pred_check
      _
    $region71: #{tpu_custom_call.1} parent=1 // pred_check_branch
      %1105 = sbr.rel (0) target = $region73
    $region72: #{tpu_custom_call.1} parent=1 // pred_region
      %s1107 = ssub.s32 256, 256
      %1108 = vsyncadd [#allocation8], %s1107
      %s1109 = sshll.u32 [#allocation17], 4
      %s1110 = int_to_ptr.vmem [resolvable:$true] %s1109
      %1115 = dma.vmem_to_hbm [thread:$0]  %s1110, 256, %s11, [#allocation8], 128, 128, 8
    $region73: #{tpu_custom_call.1} parent=1 // pred_fallthru
      _
    // Predicated region
    $region74: #{tpu_custom_call.1} parent=1 // pred_check
      _
    $region75: #{tpu_custom_call.1} parent=1 // pred_check_branch
      %1117 = sbr.rel (0) target = $region77
    $region76: #{tpu_custom_call.1} parent=1 // pred_region
      %1118 = dma.done [#allocation8], 256
    $region77: #{tpu_custom_call.1} parent=1 // pred_fallthru
      _
    %1119 = vsyncpa [#allocation7], 1
    %1120 = vsyncpa [#allocation10], 1
    %1121 = vsyncpa [#allocation13], 1
    %1122 = vsyncpa [#allocation16], 1
    %1123 = vsyncpa [#allocation8], 1
  %1124 = vsyncmov [#allocation3]
  %s1125 = vpop.sfrf %1124
  %p1126 = scmp.eq.s32.totalorder %s1125, 0
  %p1127 = pneg %p1126
  %1129 = shalt.err (%p1127)
  %s1130 = scalar_lea.sflag [#allocation3], 1
  %1131 = vsyncmov %s1130
  %s1132 = vpop.sfrf %1131
  %p1133 = scmp.eq.s32.totalorder %s1132, 0
  %p1134 = pneg %p1133
  %1136 = shalt.err (%p1134)

</llo_original>
